<compile_context>
chip_gen: v5e
topology: v5e:2x2
jax: 0.10.0
libtpu: 0.0.40
codegen_flags: <defaults>
</compile_context>

<pallas_src>
import jax
import jax.numpy as jnp
from jax.experimental import pallas as pl

BN_EPS = 1e-5
L = 6                                                   # number of stride-2 conv stages
CHANNELS = [(1, 8), (8, 16), (16, 32), (32, 64), (64, 32), (32, 16)]
COUTS = [co for _, co in CHANNELS]                      # [8, 16, 32, 64, 32, 16]
C_TOTAL = sum(COUTS)                                    # 168
BN_OFFS = [sum(COUTS[:i]) for i in range(L)]            # [0, 8, 24, 56, 120, 152]
W_ROW_OFFS = [sum(COUTS[1:i]) for i in range(1, L)]     # [0, 16, 48, 112, 144]
W_SLAB_ROWS = sum(COUTS[1:])                            # 160
W_SLAB_COLS = 4 * max(ci for ci, _ in CHANNELS[1:])     # 256
MATMUL_DTYPE = jnp.float32                              # set to jnp.bfloat16 on v6e/v7x (see header)


# ----------------------------------------------------------------------------
# Fused Pallas kernel
# ----------------------------------------------------------------------------
def discriminator_kernel(p1_ref, w1_ref, wconv_ref, bn_ref, whead_ref,
                         fake_ref, genre_ref):
    def bn_relu(z, layer):
        # BatchNorm2d, training-mode stats over the whole (N, H, W) patch axis
        # (= lane axis; lane reduces go to the XLU slot).  Exact only because
        # the kernel is grid-less over the patch axis.
        off, cout = BN_OFFS[layer], COUTS[layer]
        b = bn_ref[off:off + cout, :]                                   # [cout, 1]
        g = bn_ref[C_TOTAL + off:C_TOTAL + off + cout, :]
        be = bn_ref[2 * C_TOTAL + off:2 * C_TOTAL + off + cout, :]
        z = z + b            # conv bias (cancels under train-BN, kept for faithfulness)
        mean = jnp.mean(z, axis=1, keepdims=True)
        var = jnp.mean(jnp.square(z - mean), axis=1, keepdims=True)     # biased var
        y = (z - mean) * jax.lax.rsqrt(var + BN_EPS) * g + be
        return jnp.maximum(y, 0.0)

    # ---- stage 1: K = Cin*2*2 = 4 -> VPU broadcast-FMA, skip the MXU.
    p1 = p1_ref[...]                                 # [4, M1]  im2col'd input
    w1 = w1_ref[...]                                 # [C1, 4]
    w1c = [w1[:, k:k + 1] for k in range(4)]         # hoisted column slices
    z = w1c[0] * p1[0:1, :]
    for k in range(1, 4):
        z = z + w1c[k] * p1[k:k + 1, :]
    act = bn_relu(z, 0)                              # [C1, M1]

    # ---- stages 2..6: Morton lane order makes each stage's 4 taps four
    #      *contiguous* lane slices of the previous activation; stack them
    #      along sublanes and contract the folded weight in ONE MXU dot.
    for li in range(1, L):
        cin, cout = CHANNELS[li]
        r0 = W_ROW_OFFS[li - 1]
        wf = wconv_ref[r0:r0 + cout, 0:4 * cin]      # [cout, 4*cin]
        m_out = act.shape[1] // 4
        a = act.astype(MATMUL_DTYPE)
        a_stack = jnp.concatenate(
            [a[:, t * m_out:(t + 1) * m_out] for t in range(4)], axis=0)   # [4*cin, m_out]
        z = jnp.dot(wf, a_stack, preferred_element_type=jnp.float32)       # [cout, m_out]
        act = bn_relu(z, li)

    # ---- fused heads.  Spatial is already 1x1, so `act` is the pooled
    #      [16, B] feature matrix.  One TN dot gives the logits directly in
    #      the [B, 1 + num_classes] output orientation (no wrapper-side .T).
    y = act                                          # [16, B]
    logits_t = jax.lax.dot_general(
        y, whead_ref[...],
        dimension_numbers=(((0,), (0,)), ((), ())),
        preferred_element_type=jnp.float32)          # [B, 1 + NC]
    fake_ref[...] = 1.0 / (1.0 + jnp.exp(-logits_t[:, 0:1]))     # exact sigmoid
    cls = logits_t[:, 1:]                            # [B, NC]
    m = jnp.max(cls, axis=0, keepdims=True)          # softmax over batch (torch dim=0)
    e = jnp.exp(cls - m)
    genre_ref[...] = e / jnp.sum(e, axis=0, keepdims=True)       # exact division


# ----------------------------------------------------------------------------
# Wrappers
# ----------------------------------------------------------------------------
def _morton_im2col(x_nchw):
    """[B, C, 2^L, 2^L] NCHW image -> [4*C, B*4^(L-1)] stage-1 im2col matrix.

    Rows: (kh1, kw1, cin).  Lanes: (kh2, kw2, ..., khL, kwL, b), i.e. every
    later stage's 2x2 sub-position occupies the most-significant lane bits so
    its space-to-depth inside the kernel is 4 contiguous lane slices.
    """
    B, C, H, W = x_nchw.shape
    # TODO(synk): inputs larger than 64x64 would need an extra in-kernel mean
    # over residual spatial lanes for AdaptiveAvgPool2d(1); the module's
    # minimal 64x64 case (pool == identity) is what is implemented here.
    assert H == W == 2 ** L, "kernel handles the module's minimal 64x64 input"
    xb = x_nchw.reshape((B, C) + (2,) * L + (2,) * L)
    kh = lambda l: 2 + (L - l)           # axis holding bit kh_l (MSB-first split)
    kw = lambda l: 2 + L + (L - l)
    perm = (kh(1), kw(1), 1) + tuple(a for l in range(2, L + 1)
                                     for a in (kh(l), kw(l))) + (0,)
    xt = jnp.transpose(xb, perm)
    return xt.reshape(4 * C, B * 4 ** (L - 1))


def pack_params(params):
    """One-time packing of module weights into the kernel's 4 weight operands.

    Runs OUTSIDE the per-call jit: pure layout work is not paid per inference.
    """
    convs = params["convs"]

    # Stage-1 weight for the VPU path: [C1, (kh, kw, cin)], cin = 1.
    w1 = jnp.transpose(convs[0][0], (0, 2, 3, 1)).reshape(
        COUTS[0], 4 * CHANNELS[0][0]).astype(jnp.float32)

    # Stages 2..6: tap-folded weights [Cout, 4*Cin] packed into one slab.
    # Column index = tap*Cin + cin with tap = kh*2 + kw (matches a_stack rows).
    wconv = jnp.zeros((W_SLAB_ROWS, W_SLAB_COLS), MATMUL_DTYPE)
    for li in range(1, L):
        cin, cout = CHANNELS[li]
        wf = jnp.transpose(convs[li][0], (0, 2, 3, 1)).reshape(cout, 4 * cin)
        r0 = W_ROW_OFFS[li - 1]
        wconv = wconv.at[r0:r0 + cout, 0:4 * cin].set(wf.astype(MATMUL_DTYPE))

    # BN slab [3*168, 1]: rows [0:168) conv bias, [168:336) gamma, [336:504) beta.
    bias = jnp.concatenate([c[1] for c in convs])
    gamma = jnp.concatenate([c[2] for c in convs])
    beta = jnp.concatenate([c[3] for c in convs])
    bn = jnp.concatenate([bias, gamma, beta]).astype(jnp.float32).reshape(3 * C_TOTAL, 1)

    # Heads stacked and pre-transposed: [16, 1 + num_classes], column 0 = fc.
    whead = jnp.concatenate([params["fc"].T, params["fc_classif"].T],
                            axis=1).astype(jnp.float32)
    return {"w1": w1, "wconv": wconv, "bn": bn, "whead": whead}


@jax.jit
def discriminator_forward(x_nchw, packed):
    """Returns (predict_genre [B, num_classes], predict_fake [B, 1])."""
    B = x_nchw.shape[0]
    num_classes = packed["whead"].shape[1] - 1
    p1 = _morton_im2col(x_nchw.astype(jnp.float32))
    fake, genre = pl.pallas_call(
        discriminator_kernel,
        out_shape=(jax.ShapeDtypeStruct((B, 1), jnp.float32),
                   jax.ShapeDtypeStruct((B, num_classes), jnp.float32)),
    )(p1, packed["w1"], packed["wconv"], packed["bn"], packed["whead"])
    return genre, fake            # same return order as the PyTorch module


def reference_forward(x_nchw, params):
    """Pure-XLA reference with identical semantics (training-mode BN stats)."""
    h = x_nchw.astype(jnp.float32)
    for (w, b, g, be) in params["convs"]:
        h = jax.lax.conv_general_dilated(
            h, w.astype(jnp.float32), window_strides=(2, 2), padding="VALID",
            dimension_numbers=("NCHW", "OIHW", "NCHW"))
        h = h + b.reshape(1, -1, 1, 1)
        mean = jnp.mean(h, axis=(0, 2, 3), keepdims=True)
        var = jnp.mean(jnp.square(h - mean), axis=(0, 2, 3), keepdims=True)
        h = (h - mean) * jax.lax.rsqrt(var + BN_EPS)
        h = jnp.maximum(h * g.reshape(1, -1, 1, 1) + be.reshape(1, -1, 1, 1), 0.0)
    y = jnp.mean(h, axis=(2, 3))                     # AdaptiveAvgPool2d(1) + flatten
    predict_fake = jax.nn.sigmoid(y @ params["fc"].T)
    predict_genre = jax.nn.softmax(y @ params["fc_classif"].T, axis=0)
    return predict_genre, predict_fake


def init_params(key, num_classes):
    convs = []
    for (cin, cout) in CHANNELS:
        key, k1, k2 = jax.random.split(key, 3)
        w = 0.1 * jax.random.normal(k1, (cout, cin, 2, 2), jnp.float32)
        b = 0.1 * jax.random.normal(k2, (cout,), jnp.float32)
        gamma = jnp.ones((cout,), jnp.float32)       # BatchNorm default affine init
        beta = jnp.zeros((cout,), jnp.float32)
        convs.append((w, b, gamma, beta))
    key, k1, k2 = jax.random.split(key, 3)
    fc = 0.1 * jax.random.normal(k1, (1, 16), jnp.float32)               # bias=False
    fc_classif = 0.1 * jax.random.normal(k2, (num_classes, 16), jnp.float32)
    return {"convs": convs, "fc": fc, "fc_classif": fc_classif}


if __name__ == "__main__":
    num_classes = 10
    key = jax.random.PRNGKey(0)
    key, kx = jax.random.split(key)
    # 6 stride-2 k=2 convs require spatial >= 64; the module takes 1 input channel.
    x = jax.random.normal(kx, (2, 1, 64, 64), jnp.float32)    # NCHW, as in PyTorch
    params = init_params(key, num_classes)
    packed = pack_params(params)          # one-time packing, outside the hot jit

    predict_genre, predict_fake = discriminator_forward(x, packed)
    predict_genre = jax.block_until_ready(predict_genre)
    predict_fake = jax.block_until_ready(predict_fake)

    assert predict_genre.shape == (2, num_classes)
    assert predict_fake.shape == (2, 1)
    assert bool(jnp.all(jnp.isfinite(predict_genre)))
    assert bool(jnp.all(jnp.isfinite(predict_fake)))
    # Softmax over dim=0 (batch axis): exact division -> columns sum to 1.
    assert bool(jnp.allclose(jnp.sum(predict_genre, axis=0), 1.0, atol=1e-5))

    # Verify the fused kernel against a pure-XLA reference of the same module.
    ref_genre, ref_fake = reference_forward(x, params)
    assert bool(jnp.allclose(predict_genre, ref_genre, atol=2e-2)), (
        float(jnp.max(jnp.abs(predict_genre - ref_genre))))
    assert bool(jnp.allclose(predict_fake, ref_fake, atol=2e-2)), (
        float(jnp.max(jnp.abs(predict_fake - ref_fake))))
    print("KERNEL_OK")
</pallas_src>

<mosaic_0001>
module attributes {stable_mosaic.version = 11 : i64} {
  func.func @discriminator_kernel(%arg0: memref<4x2048xf32, #tpu.memory_space<vmem>>, %arg1: memref<8x4xf32, #tpu.memory_space<vmem>>, %arg2: memref<160x256xf32, #tpu.memory_space<vmem>>, %arg3: memref<504x1xf32, #tpu.memory_space<vmem>>, %arg4: memref<16x11xf32, #tpu.memory_space<vmem>>, %arg5: memref<2x1xf32, #tpu.memory_space<vmem>>, %arg6: memref<2x10xf32, #tpu.memory_space<vmem>>) attributes {dimension_semantics = [], scalar_prefetch = 0 : i64, scratch_operands = 0 : i64, tpu.core_type = #tpu.core_type<tc>} {
    %c0 = arith.constant 0 : index
    %c0_0 = arith.constant 0 : index
    %0 = vector.load %arg0[%c0, %c0_0] : memref<4x2048xf32, #tpu.memory_space<vmem>>, vector<4x2048xf32>
    %c0_1 = arith.constant 0 : index
    %c0_2 = arith.constant 0 : index
    %1 = vector.load %arg1[%c0_1, %c0_2] : memref<8x4xf32, #tpu.memory_space<vmem>>, vector<8x4xf32>
    %2 = vector.extract_strided_slice %1 {offsets = [0, 0], sizes = [8, 1], strides = [1, 1]} : vector<8x4xf32> to vector<8x1xf32>
    %3 = vector.extract_strided_slice %1 {offsets = [0, 1], sizes = [8, 1], strides = [1, 1]} : vector<8x4xf32> to vector<8x1xf32>
    %4 = vector.extract_strided_slice %1 {offsets = [0, 2], sizes = [8, 1], strides = [1, 1]} : vector<8x4xf32> to vector<8x1xf32>
    %5 = vector.extract_strided_slice %1 {offsets = [0, 3], sizes = [8, 1], strides = [1, 1]} : vector<8x4xf32> to vector<8x1xf32>
    %6 = vector.extract_strided_slice %0 {offsets = [0, 0], sizes = [1, 2048], strides = [1, 1]} : vector<4x2048xf32> to vector<1x2048xf32>
    %7 = vector.broadcast %2 : vector<8x1xf32> to vector<8x2048xf32>
    %8 = vector.broadcast %6 : vector<1x2048xf32> to vector<8x2048xf32>
    %9 = arith.mulf %7, %8 : vector<8x2048xf32>
    %10 = vector.extract_strided_slice %0 {offsets = [1, 0], sizes = [1, 2048], strides = [1, 1]} : vector<4x2048xf32> to vector<1x2048xf32>
    %11 = vector.broadcast %3 : vector<8x1xf32> to vector<8x2048xf32>
    %12 = vector.broadcast %10 : vector<1x2048xf32> to vector<8x2048xf32>
    %13 = arith.mulf %11, %12 : vector<8x2048xf32>
    %14 = arith.addf %9, %13 : vector<8x2048xf32>
    %15 = vector.extract_strided_slice %0 {offsets = [2, 0], sizes = [1, 2048], strides = [1, 1]} : vector<4x2048xf32> to vector<1x2048xf32>
    %16 = vector.broadcast %4 : vector<8x1xf32> to vector<8x2048xf32>
    %17 = vector.broadcast %15 : vector<1x2048xf32> to vector<8x2048xf32>
    %18 = arith.mulf %16, %17 : vector<8x2048xf32>
    %19 = arith.addf %14, %18 : vector<8x2048xf32>
    %20 = vector.extract_strided_slice %0 {offsets = [3, 0], sizes = [1, 2048], strides = [1, 1]} : vector<4x2048xf32> to vector<1x2048xf32>
    %21 = vector.broadcast %5 : vector<8x1xf32> to vector<8x2048xf32>
    %22 = vector.broadcast %20 : vector<1x2048xf32> to vector<8x2048xf32>
    %23 = arith.mulf %21, %22 : vector<8x2048xf32>
    %24 = arith.addf %19, %23 : vector<8x2048xf32>
    %c0_3 = arith.constant 0 : index
    %c0_4 = arith.constant 0 : index
    %25 = vector.load %arg3[%c0_3, %c0_4] : memref<504x1xf32, #tpu.memory_space<vmem>>, vector<8x1xf32>
    %c168 = arith.constant 168 : index
    %c0_5 = arith.constant 0 : index
    %26 = vector.load %arg3[%c168, %c0_5] : memref<504x1xf32, #tpu.memory_space<vmem>>, vector<8x1xf32>
    %c336 = arith.constant 336 : index
    %c0_6 = arith.constant 0 : index
    %27 = vector.load %arg3[%c336, %c0_6] : memref<504x1xf32, #tpu.memory_space<vmem>>, vector<8x1xf32>
    %28 = vector.broadcast %25 : vector<8x1xf32> to vector<8x2048xf32>
    %29 = arith.addf %24, %28 : vector<8x2048xf32>
    %cst = arith.constant dense<0.000000e+00> : vector<8xf32>
    %30 = vector.multi_reduction <add>, %29, %cst [1] : vector<8x2048xf32> to vector<8xf32>
    %31 = vector.shape_cast %30 : vector<8xf32> to vector<8x1xf32>
    %cst_7 = arith.constant 2.048000e+03 : f32
    %32 = vector.broadcast %cst_7 : f32 to vector<8x1xf32>
    %33 = arith.divf %31, %32 : vector<8x1xf32>
    %34 = vector.broadcast %33 : vector<8x1xf32> to vector<8x2048xf32>
    %35 = arith.subf %29, %34 : vector<8x2048xf32>
    %36 = arith.mulf %35, %35 : vector<8x2048xf32>
    %cst_8 = arith.constant dense<0.000000e+00> : vector<8xf32>
    %37 = vector.multi_reduction <add>, %36, %cst_8 [1] : vector<8x2048xf32> to vector<8xf32>
    %38 = vector.shape_cast %37 : vector<8xf32> to vector<8x1xf32>
    %cst_9 = arith.constant 2.048000e+03 : f32
    %39 = vector.broadcast %cst_9 : f32 to vector<8x1xf32>
    %40 = arith.divf %38, %39 : vector<8x1xf32>
    %41 = vector.broadcast %33 : vector<8x1xf32> to vector<8x2048xf32>
    %42 = arith.subf %29, %41 : vector<8x2048xf32>
    %cst_10 = arith.constant 9.99999974E-6 : f32
    %43 = vector.broadcast %cst_10 : f32 to vector<8x1xf32>
    %44 = arith.addf %40, %43 : vector<8x1xf32>
    %45 = math.rsqrt %44 : vector<8x1xf32>
    %46 = vector.broadcast %45 : vector<8x1xf32> to vector<8x2048xf32>
    %47 = arith.mulf %42, %46 : vector<8x2048xf32>
    %48 = vector.broadcast %26 : vector<8x1xf32> to vector<8x2048xf32>
    %49 = arith.mulf %47, %48 : vector<8x2048xf32>
    %50 = vector.broadcast %27 : vector<8x1xf32> to vector<8x2048xf32>
    %51 = arith.addf %49, %50 : vector<8x2048xf32>
    %cst_11 = arith.constant 0.000000e+00 : f32
    %52 = vector.broadcast %cst_11 : f32 to vector<8x2048xf32>
    %53 = arith.maximumf %51, %52 : vector<8x2048xf32>
    %c0_12 = arith.constant 0 : index
    %c0_13 = arith.constant 0 : index
    %54 = vector.load %arg2[%c0_12, %c0_13] : memref<160x256xf32, #tpu.memory_space<vmem>>, vector<16x32xf32>
    %55 = vector.extract_strided_slice %53 {offsets = [0, 0], sizes = [8, 512], strides = [1, 1]} : vector<8x2048xf32> to vector<8x512xf32>
    %56 = vector.extract_strided_slice %53 {offsets = [0, 512], sizes = [8, 512], strides = [1, 1]} : vector<8x2048xf32> to vector<8x512xf32>
    %57 = vector.extract_strided_slice %53 {offsets = [0, 1024], sizes = [8, 512], strides = [1, 1]} : vector<8x2048xf32> to vector<8x512xf32>
    %58 = vector.extract_strided_slice %53 {offsets = [0, 1536], sizes = [8, 512], strides = [1, 1]} : vector<8x2048xf32> to vector<8x512xf32>
    %59 = tpu.concatenate %55, %56, %57, %58 in 0 : vector<8x512xf32>, vector<8x512xf32>, vector<8x512xf32>, vector<8x512xf32> -> vector<32x512xf32>
    %cst_14 = arith.constant dense<0.000000e+00> : vector<16x512xf32>
    %60 = tpu.matmul %54, %59, %cst_14 {dimension_numbers = #tpu.dot_dimension_numbers<[1], [0], [0], [1], [0, 0, 1, 1], [], []>} : vector<16x32xf32>, vector<32x512xf32>, vector<16x512xf32> -> vector<16x512xf32>
    %c8 = arith.constant 8 : index
    %c0_15 = arith.constant 0 : index
    %61 = vector.load %arg3[%c8, %c0_15] : memref<504x1xf32, #tpu.memory_space<vmem>>, vector<16x1xf32>
    %c176 = arith.constant 176 : index
    %c0_16 = arith.constant 0 : index
    %62 = vector.load %arg3[%c176, %c0_16] : memref<504x1xf32, #tpu.memory_space<vmem>>, vector<16x1xf32>
    %c344 = arith.constant 344 : index
    %c0_17 = arith.constant 0 : index
    %63 = vector.load %arg3[%c344, %c0_17] : memref<504x1xf32, #tpu.memory_space<vmem>>, vector<16x1xf32>
    %64 = vector.broadcast %61 : vector<16x1xf32> to vector<16x512xf32>
    %65 = arith.addf %60, %64 : vector<16x512xf32>
    %cst_18 = arith.constant dense<0.000000e+00> : vector<16xf32>
    %66 = vector.multi_reduction <add>, %65, %cst_18 [1] : vector<16x512xf32> to vector<16xf32>
    %67 = vector.shape_cast %66 : vector<16xf32> to vector<16x1xf32>
    %cst_19 = arith.constant 5.120000e+02 : f32
    %68 = vector.broadcast %cst_19 : f32 to vector<16x1xf32>
    %69 = arith.divf %67, %68 : vector<16x1xf32>
    %70 = vector.broadcast %69 : vector<16x1xf32> to vector<16x512xf32>
    %71 = arith.subf %65, %70 : vector<16x512xf32>
    %72 = arith.mulf %71, %71 : vector<16x512xf32>
    %cst_20 = arith.constant dense<0.000000e+00> : vector<16xf32>
    %73 = vector.multi_reduction <add>, %72, %cst_20 [1] : vector<16x512xf32> to vector<16xf32>
    %74 = vector.shape_cast %73 : vector<16xf32> to vector<16x1xf32>
    %cst_21 = arith.constant 5.120000e+02 : f32
    %75 = vector.broadcast %cst_21 : f32 to vector<16x1xf32>
    %76 = arith.divf %74, %75 : vector<16x1xf32>
    %77 = vector.broadcast %69 : vector<16x1xf32> to vector<16x512xf32>
    %78 = arith.subf %65, %77 : vector<16x512xf32>
    %cst_22 = arith.constant 9.99999974E-6 : f32
    %79 = vector.broadcast %cst_22 : f32 to vector<16x1xf32>
    %80 = arith.addf %76, %79 : vector<16x1xf32>
    %81 = math.rsqrt %80 : vector<16x1xf32>
    %82 = vector.broadcast %81 : vector<16x1xf32> to vector<16x512xf32>
    %83 = arith.mulf %78, %82 : vector<16x512xf32>
    %84 = vector.broadcast %62 : vector<16x1xf32> to vector<16x512xf32>
    %85 = arith.mulf %83, %84 : vector<16x512xf32>
    %86 = vector.broadcast %63 : vector<16x1xf32> to vector<16x512xf32>
    %87 = arith.addf %85, %86 : vector<16x512xf32>
    %cst_23 = arith.constant 0.000000e+00 : f32
    %88 = vector.broadcast %cst_23 : f32 to vector<16x512xf32>
    %89 = arith.maximumf %87, %88 : vector<16x512xf32>
    %c16 = arith.constant 16 : index
    %c0_24 = arith.constant 0 : index
    %90 = vector.load %arg2[%c16, %c0_24] : memref<160x256xf32, #tpu.memory_space<vmem>>, vector<32x64xf32>
    %91 = vector.extract_strided_slice %89 {offsets = [0, 0], sizes = [16, 128], strides = [1, 1]} : vector<16x512xf32> to vector<16x128xf32>
    %92 = vector.extract_strided_slice %89 {offsets = [0, 128], sizes = [16, 128], strides = [1, 1]} : vector<16x512xf32> to vector<16x128xf32>
    %93 = vector.extract_strided_slice %89 {offsets = [0, 256], sizes = [16, 128], strides = [1, 1]} : vector<16x512xf32> to vector<16x128xf32>
    %94 = vector.extract_strided_slice %89 {offsets = [0, 384], sizes = [16, 128], strides = [1, 1]} : vector<16x512xf32> to vector<16x128xf32>
    %95 = tpu.concatenate %91, %92, %93, %94 in 0 : vector<16x128xf32>, vector<16x128xf32>, vector<16x128xf32>, vector<16x128xf32> -> vector<64x128xf32>
    %cst_25 = arith.constant dense<0.000000e+00> : vector<32x128xf32>
    %96 = tpu.matmul %90, %95, %cst_25 {dimension_numbers = #tpu.dot_dimension_numbers<[1], [0], [0], [1], [0, 0, 1, 1], [], []>} : vector<32x64xf32>, vector<64x128xf32>, vector<32x128xf32> -> vector<32x128xf32>
    %c24 = arith.constant 24 : index
    %c0_26 = arith.constant 0 : index
    %97 = vector.load %arg3[%c24, %c0_26] : memref<504x1xf32, #tpu.memory_space<vmem>>, vector<32x1xf32>
    %c192 = arith.constant 192 : index
    %c0_27 = arith.constant 0 : index
    %98 = vector.load %arg3[%c192, %c0_27] : memref<504x1xf32, #tpu.memory_space<vmem>>, vector<32x1xf32>
    %c360 = arith.constant 360 : index
    %c0_28 = arith.constant 0 : index
    %99 = vector.load %arg3[%c360, %c0_28] : memref<504x1xf32, #tpu.memory_space<vmem>>, vector<32x1xf32>
    %100 = vector.broadcast %97 : vector<32x1xf32> to vector<32x128xf32>
    %101 = arith.addf %96, %100 : vector<32x128xf32>
    %cst_29 = arith.constant dense<0.000000e+00> : vector<32xf32>
    %102 = vector.multi_reduction <add>, %101, %cst_29 [1] : vector<32x128xf32> to vector<32xf32>
    %103 = vector.shape_cast %102 : vector<32xf32> to vector<32x1xf32>
    %cst_30 = arith.constant 1.280000e+02 : f32
    %104 = vector.broadcast %cst_30 : f32 to vector<32x1xf32>
    %105 = arith.divf %103, %104 : vector<32x1xf32>
    %106 = vector.broadcast %105 : vector<32x1xf32> to vector<32x128xf32>
    %107 = arith.subf %101, %106 : vector<32x128xf32>
    %108 = arith.mulf %107, %107 : vector<32x128xf32>
    %cst_31 = arith.constant dense<0.000000e+00> : vector<32xf32>
    %109 = vector.multi_reduction <add>, %108, %cst_31 [1] : vector<32x128xf32> to vector<32xf32>
    %110 = vector.shape_cast %109 : vector<32xf32> to vector<32x1xf32>
    %cst_32 = arith.constant 1.280000e+02 : f32
    %111 = vector.broadcast %cst_32 : f32 to vector<32x1xf32>
    %112 = arith.divf %110, %111 : vector<32x1xf32>
    %113 = vector.broadcast %105 : vector<32x1xf32> to vector<32x128xf32>
    %114 = arith.subf %101, %113 : vector<32x128xf32>
    %cst_33 = arith.constant 9.99999974E-6 : f32
    %115 = vector.broadcast %cst_33 : f32 to vector<32x1xf32>
    %116 = arith.addf %112, %115 : vector<32x1xf32>
    %117 = math.rsqrt %116 : vector<32x1xf32>
    %118 = vector.broadcast %117 : vector<32x1xf32> to vector<32x128xf32>
    %119 = arith.mulf %114, %118 : vector<32x128xf32>
    %120 = vector.broadcast %98 : vector<32x1xf32> to vector<32x128xf32>
    %121 = arith.mulf %119, %120 : vector<32x128xf32>
    %122 = vector.broadcast %99 : vector<32x1xf32> to vector<32x128xf32>
    %123 = arith.addf %121, %122 : vector<32x128xf32>
    %cst_34 = arith.constant 0.000000e+00 : f32
    %124 = vector.broadcast %cst_34 : f32 to vector<32x128xf32>
    %125 = arith.maximumf %123, %124 : vector<32x128xf32>
    %c48 = arith.constant 48 : index
    %c0_35 = arith.constant 0 : index
    %126 = vector.load %arg2[%c48, %c0_35] : memref<160x256xf32, #tpu.memory_space<vmem>>, vector<64x128xf32>
    %127 = vector.extract_strided_slice %125 {offsets = [0, 0], sizes = [32, 32], strides = [1, 1]} : vector<32x128xf32> to vector<32x32xf32>
    %128 = vector.extract_strided_slice %125 {offsets = [0, 32], sizes = [32, 32], strides = [1, 1]} : vector<32x128xf32> to vector<32x32xf32>
    %129 = vector.extract_strided_slice %125 {offsets = [0, 64], sizes = [32, 32], strides = [1, 1]} : vector<32x128xf32> to vector<32x32xf32>
    %130 = vector.extract_strided_slice %125 {offsets = [0, 96], sizes = [32, 32], strides = [1, 1]} : vector<32x128xf32> to vector<32x32xf32>
    %131 = tpu.concatenate %127, %128, %129, %130 in 0 : vector<32x32xf32>, vector<32x32xf32>, vector<32x32xf32>, vector<32x32xf32> -> vector<128x32xf32>
    %cst_36 = arith.constant dense<0.000000e+00> : vector<64x32xf32>
    %132 = tpu.matmul %126, %131, %cst_36 {dimension_numbers = #tpu.dot_dimension_numbers<[1], [0], [0], [1], [0, 0, 1, 1], [], []>} : vector<64x128xf32>, vector<128x32xf32>, vector<64x32xf32> -> vector<64x32xf32>
    %c56 = arith.constant 56 : index
    %c0_37 = arith.constant 0 : index
    %133 = vector.load %arg3[%c56, %c0_37] : memref<504x1xf32, #tpu.memory_space<vmem>>, vector<64x1xf32>
    %c224 = arith.constant 224 : index
    %c0_38 = arith.constant 0 : index
    %134 = vector.load %arg3[%c224, %c0_38] : memref<504x1xf32, #tpu.memory_space<vmem>>, vector<64x1xf32>
    %c392 = arith.constant 392 : index
    %c0_39 = arith.constant 0 : index
    %135 = vector.load %arg3[%c392, %c0_39] : memref<504x1xf32, #tpu.memory_space<vmem>>, vector<64x1xf32>
    %136 = vector.broadcast %133 : vector<64x1xf32> to vector<64x32xf32>
    %137 = arith.addf %132, %136 : vector<64x32xf32>
    %cst_40 = arith.constant dense<0.000000e+00> : vector<64xf32>
    %138 = vector.multi_reduction <add>, %137, %cst_40 [1] : vector<64x32xf32> to vector<64xf32>
    %139 = vector.shape_cast %138 : vector<64xf32> to vector<64x1xf32>
    %cst_41 = arith.constant 3.200000e+01 : f32
    %140 = vector.broadcast %cst_41 : f32 to vector<64x1xf32>
    %141 = arith.divf %139, %140 : vector<64x1xf32>
    %142 = vector.broadcast %141 : vector<64x1xf32> to vector<64x32xf32>
    %143 = arith.subf %137, %142 : vector<64x32xf32>
    %144 = arith.mulf %143, %143 : vector<64x32xf32>
    %cst_42 = arith.constant dense<0.000000e+00> : vector<64xf32>
    %145 = vector.multi_reduction <add>, %144, %cst_42 [1] : vector<64x32xf32> to vector<64xf32>
    %146 = vector.shape_cast %145 : vector<64xf32> to vector<64x1xf32>
    %cst_43 = arith.constant 3.200000e+01 : f32
    %147 = vector.broadcast %cst_43 : f32 to vector<64x1xf32>
    %148 = arith.divf %146, %147 : vector<64x1xf32>
    %149 = vector.broadcast %141 : vector<64x1xf32> to vector<64x32xf32>
    %150 = arith.subf %137, %149 : vector<64x32xf32>
    %cst_44 = arith.constant 9.99999974E-6 : f32
    %151 = vector.broadcast %cst_44 : f32 to vector<64x1xf32>
    %152 = arith.addf %148, %151 : vector<64x1xf32>
    %153 = math.rsqrt %152 : vector<64x1xf32>
    %154 = vector.broadcast %153 : vector<64x1xf32> to vector<64x32xf32>
    %155 = arith.mulf %150, %154 : vector<64x32xf32>
    %156 = vector.broadcast %134 : vector<64x1xf32> to vector<64x32xf32>
    %157 = arith.mulf %155, %156 : vector<64x32xf32>
    %158 = vector.broadcast %135 : vector<64x1xf32> to vector<64x32xf32>
    %159 = arith.addf %157, %158 : vector<64x32xf32>
    %cst_45 = arith.constant 0.000000e+00 : f32
    %160 = vector.broadcast %cst_45 : f32 to vector<64x32xf32>
    %161 = arith.maximumf %159, %160 : vector<64x32xf32>
    %c112 = arith.constant 112 : index
    %c0_46 = arith.constant 0 : index
    %162 = vector.load %arg2[%c112, %c0_46] : memref<160x256xf32, #tpu.memory_space<vmem>>, vector<32x256xf32>
    %163 = vector.extract_strided_slice %161 {offsets = [0, 0], sizes = [64, 8], strides = [1, 1]} : vector<64x32xf32> to vector<64x8xf32>
    %164 = vector.extract_strided_slice %161 {offsets = [0, 8], sizes = [64, 8], strides = [1, 1]} : vector<64x32xf32> to vector<64x8xf32>
    %165 = vector.extract_strided_slice %161 {offsets = [0, 16], sizes = [64, 8], strides = [1, 1]} : vector<64x32xf32> to vector<64x8xf32>
    %166 = vector.extract_strided_slice %161 {offsets = [0, 24], sizes = [64, 8], strides = [1, 1]} : vector<64x32xf32> to vector<64x8xf32>
    %167 = tpu.concatenate %163, %164, %165, %166 in 0 : vector<64x8xf32>, vector<64x8xf32>, vector<64x8xf32>, vector<64x8xf32> -> vector<256x8xf32>
    %cst_47 = arith.constant dense<0.000000e+00> : vector<32x8xf32>
    %168 = tpu.matmul %162, %167, %cst_47 {dimension_numbers = #tpu.dot_dimension_numbers<[1], [0], [0], [1], [0, 0, 1, 1], [], []>} : vector<32x256xf32>, vector<256x8xf32>, vector<32x8xf32> -> vector<32x8xf32>
    %c120 = arith.constant 120 : index
    %c0_48 = arith.constant 0 : index
    %169 = vector.load %arg3[%c120, %c0_48] : memref<504x1xf32, #tpu.memory_space<vmem>>, vector<32x1xf32>
    %c288 = arith.constant 288 : index
    %c0_49 = arith.constant 0 : index
    %170 = vector.load %arg3[%c288, %c0_49] : memref<504x1xf32, #tpu.memory_space<vmem>>, vector<32x1xf32>
    %c456 = arith.constant 456 : index
    %c0_50 = arith.constant 0 : index
    %171 = vector.load %arg3[%c456, %c0_50] : memref<504x1xf32, #tpu.memory_space<vmem>>, vector<32x1xf32>
    %172 = vector.broadcast %169 : vector<32x1xf32> to vector<32x8xf32>
    %173 = arith.addf %168, %172 : vector<32x8xf32>
    %cst_51 = arith.constant dense<0.000000e+00> : vector<32xf32>
    %174 = vector.multi_reduction <add>, %173, %cst_51 [1] : vector<32x8xf32> to vector<32xf32>
    %175 = vector.shape_cast %174 : vector<32xf32> to vector<32x1xf32>
    %cst_52 = arith.constant 8.000000e+00 : f32
    %176 = vector.broadcast %cst_52 : f32 to vector<32x1xf32>
    %177 = arith.divf %175, %176 : vector<32x1xf32>
    %178 = vector.broadcast %177 : vector<32x1xf32> to vector<32x8xf32>
    %179 = arith.subf %173, %178 : vector<32x8xf32>
    %180 = arith.mulf %179, %179 : vector<32x8xf32>
    %cst_53 = arith.constant dense<0.000000e+00> : vector<32xf32>
    %181 = vector.multi_reduction <add>, %180, %cst_53 [1] : vector<32x8xf32> to vector<32xf32>
    %182 = vector.shape_cast %181 : vector<32xf32> to vector<32x1xf32>
    %cst_54 = arith.constant 8.000000e+00 : f32
    %183 = vector.broadcast %cst_54 : f32 to vector<32x1xf32>
    %184 = arith.divf %182, %183 : vector<32x1xf32>
    %185 = vector.broadcast %177 : vector<32x1xf32> to vector<32x8xf32>
    %186 = arith.subf %173, %185 : vector<32x8xf32>
    %cst_55 = arith.constant 9.99999974E-6 : f32
    %187 = vector.broadcast %cst_55 : f32 to vector<32x1xf32>
    %188 = arith.addf %184, %187 : vector<32x1xf32>
    %189 = math.rsqrt %188 : vector<32x1xf32>
    %190 = vector.broadcast %189 : vector<32x1xf32> to vector<32x8xf32>
    %191 = arith.mulf %186, %190 : vector<32x8xf32>
    %192 = vector.broadcast %170 : vector<32x1xf32> to vector<32x8xf32>
    %193 = arith.mulf %191, %192 : vector<32x8xf32>
    %194 = vector.broadcast %171 : vector<32x1xf32> to vector<32x8xf32>
    %195 = arith.addf %193, %194 : vector<32x8xf32>
    %cst_56 = arith.constant 0.000000e+00 : f32
    %196 = vector.broadcast %cst_56 : f32 to vector<32x8xf32>
    %197 = arith.maximumf %195, %196 : vector<32x8xf32>
    %c144 = arith.constant 144 : index
    %c0_57 = arith.constant 0 : index
    %198 = vector.load %arg2[%c144, %c0_57] : memref<160x256xf32, #tpu.memory_space<vmem>>, vector<16x128xf32>
    %199 = vector.extract_strided_slice %197 {offsets = [0, 0], sizes = [32, 2], strides = [1, 1]} : vector<32x8xf32> to vector<32x2xf32>
    %200 = vector.extract_strided_slice %197 {offsets = [0, 2], sizes = [32, 2], strides = [1, 1]} : vector<32x8xf32> to vector<32x2xf32>
    %201 = vector.extract_strided_slice %197 {offsets = [0, 4], sizes = [32, 2], strides = [1, 1]} : vector<32x8xf32> to vector<32x2xf32>
    %202 = vector.extract_strided_slice %197 {offsets = [0, 6], sizes = [32, 2], strides = [1, 1]} : vector<32x8xf32> to vector<32x2xf32>
    %203 = tpu.concatenate %199, %200, %201, %202 in 0 : vector<32x2xf32>, vector<32x2xf32>, vector<32x2xf32>, vector<32x2xf32> -> vector<128x2xf32>
    %cst_58 = arith.constant dense<0.000000e+00> : vector<16x2xf32>
    %204 = tpu.matmul %198, %203, %cst_58 {dimension_numbers = #tpu.dot_dimension_numbers<[1], [0], [0], [1], [0, 0, 1, 1], [], []>} : vector<16x128xf32>, vector<128x2xf32>, vector<16x2xf32> -> vector<16x2xf32>
    %c152 = arith.constant 152 : index
    %c0_59 = arith.constant 0 : index
    %205 = vector.load %arg3[%c152, %c0_59] : memref<504x1xf32, #tpu.memory_space<vmem>>, vector<16x1xf32>
    %c320 = arith.constant 320 : index
    %c0_60 = arith.constant 0 : index
    %206 = vector.load %arg3[%c320, %c0_60] : memref<504x1xf32, #tpu.memory_space<vmem>>, vector<16x1xf32>
    %c488 = arith.constant 488 : index
    %c0_61 = arith.constant 0 : index
    %207 = vector.load %arg3[%c488, %c0_61] : memref<504x1xf32, #tpu.memory_space<vmem>>, vector<16x1xf32>
    %208 = vector.broadcast %205 : vector<16x1xf32> to vector<16x2xf32>
    %209 = arith.addf %204, %208 : vector<16x2xf32>
    %cst_62 = arith.constant dense<0.000000e+00> : vector<16xf32>
    %210 = vector.multi_reduction <add>, %209, %cst_62 [1] : vector<16x2xf32> to vector<16xf32>
    %211 = vector.shape_cast %210 : vector<16xf32> to vector<16x1xf32>
    %cst_63 = arith.constant 2.000000e+00 : f32
    %212 = vector.broadcast %cst_63 : f32 to vector<16x1xf32>
    %213 = arith.divf %211, %212 : vector<16x1xf32>
    %214 = vector.broadcast %213 : vector<16x1xf32> to vector<16x2xf32>
    %215 = arith.subf %209, %214 : vector<16x2xf32>
    %216 = arith.mulf %215, %215 : vector<16x2xf32>
    %cst_64 = arith.constant dense<0.000000e+00> : vector<16xf32>
    %217 = vector.multi_reduction <add>, %216, %cst_64 [1] : vector<16x2xf32> to vector<16xf32>
    %218 = vector.shape_cast %217 : vector<16xf32> to vector<16x1xf32>
    %cst_65 = arith.constant 2.000000e+00 : f32
    %219 = vector.broadcast %cst_65 : f32 to vector<16x1xf32>
    %220 = arith.divf %218, %219 : vector<16x1xf32>
    %221 = vector.broadcast %213 : vector<16x1xf32> to vector<16x2xf32>
    %222 = arith.subf %209, %221 : vector<16x2xf32>
    %cst_66 = arith.constant 9.99999974E-6 : f32
    %223 = vector.broadcast %cst_66 : f32 to vector<16x1xf32>
    %224 = arith.addf %220, %223 : vector<16x1xf32>
    %225 = math.rsqrt %224 : vector<16x1xf32>
    %226 = vector.broadcast %225 : vector<16x1xf32> to vector<16x2xf32>
    %227 = arith.mulf %222, %226 : vector<16x2xf32>
    %228 = vector.broadcast %206 : vector<16x1xf32> to vector<16x2xf32>
    %229 = arith.mulf %227, %228 : vector<16x2xf32>
    %230 = vector.broadcast %207 : vector<16x1xf32> to vector<16x2xf32>
    %231 = arith.addf %229, %230 : vector<16x2xf32>
    %cst_67 = arith.constant 0.000000e+00 : f32
    %232 = vector.broadcast %cst_67 : f32 to vector<16x2xf32>
    %233 = arith.maximumf %231, %232 : vector<16x2xf32>
    %c0_68 = arith.constant 0 : index
    %c0_69 = arith.constant 0 : index
    %234 = vector.load %arg4[%c0_68, %c0_69] : memref<16x11xf32, #tpu.memory_space<vmem>>, vector<16x11xf32>
    %cst_70 = arith.constant dense<0.000000e+00> : vector<2x11xf32>
    %235 = tpu.matmul %233, %234, %cst_70 {dimension_numbers = #tpu.dot_dimension_numbers<[0], [0], [1], [1], [0, 1, 1, 1], [], []>} : vector<16x2xf32>, vector<16x11xf32>, vector<2x11xf32> -> vector<2x11xf32>
    %236 = vector.extract_strided_slice %235 {offsets = [0, 0], sizes = [2, 1], strides = [1, 1]} : vector<2x11xf32> to vector<2x1xf32>
    %cst_71 = arith.constant 0.000000e+00 : f32
    %237 = vector.broadcast %cst_71 : f32 to vector<2x1xf32>
    %238 = arith.subf %237, %236 : vector<2x1xf32>
    %239 = math.exp %238 : vector<2x1xf32>
    %cst_72 = arith.constant 1.000000e+00 : f32
    %240 = vector.broadcast %cst_72 : f32 to vector<2x1xf32>
    %241 = arith.addf %240, %239 : vector<2x1xf32>
    %cst_73 = arith.constant 1.000000e+00 : f32
    %242 = vector.broadcast %cst_73 : f32 to vector<2x1xf32>
    %243 = arith.divf %242, %241 : vector<2x1xf32>
    %c0_74 = arith.constant 0 : index
    %c0_75 = arith.constant 0 : index
    %244 = vector.load %arg5[%c0_74, %c0_75] : memref<2x1xf32, #tpu.memory_space<vmem>>, vector<2x1xf32>
    tpu.vector_store %arg5[%c0_74, %c0_75], %243 {strides = array<i32>} : memref<2x1xf32, #tpu.memory_space<vmem>>, vector<2x1xf32>,
    %245 = vector.extract_strided_slice %235 {offsets = [0, 1], sizes = [2, 10], strides = [1, 1]} : vector<2x11xf32> to vector<2x10xf32>
    %cst_76 = arith.constant dense<0xFF800000> : vector<10xf32>
    %246 = vector.multi_reduction <maximumf>, %245, %cst_76 [0] : vector<2x10xf32> to vector<10xf32>
    %247 = vector.shape_cast %246 : vector<10xf32> to vector<1x10xf32>
    %248 = vector.broadcast %247 : vector<1x10xf32> to vector<2x10xf32>
    %249 = arith.subf %245, %248 : vector<2x10xf32>
    %250 = math.exp %249 : vector<2x10xf32>
    %cst_77 = arith.constant dense<0.000000e+00> : vector<10xf32>
    %251 = vector.multi_reduction <add>, %250, %cst_77 [0] : vector<2x10xf32> to vector<10xf32>
    %252 = vector.shape_cast %251 : vector<10xf32> to vector<1x10xf32>
    %253 = vector.broadcast %252 : vector<1x10xf32> to vector<2x10xf32>
    %254 = arith.divf %250, %253 : vector<2x10xf32>
    %c0_78 = arith.constant 0 : index
    %c0_79 = arith.constant 0 : index
    %255 = vector.load %arg6[%c0_78, %c0_79] : memref<2x10xf32, #tpu.memory_space<vmem>>, vector<2x10xf32>
    tpu.vector_store %arg6[%c0_78, %c0_79], %254 {strides = array<i32>} : memref<2x10xf32, #tpu.memory_space<vmem>>, vector<2x10xf32>,
    return
  }
}

</mosaic_0001>

<llo_original>
// kernel: discriminator_forward.1
$region0: #{discriminator_forward.1}
  #allocation0 [shape = 'u32[]', space=smem, size = 0x4, offset = 0x4, fixed_abs, tag = 'smem constant byte address 0x4 - core index']
  #allocation1 [shape = 'u32[72,128]{1,0:T(1,128)}', space=vmem, size = 0x9000, scoped, tag = 'internal scratch']
  %s0 = inlined_call_operand.vmem [shape: f32[4,2048], index: 0, kind: input, shape index: {}]
  %s1 = inlined_call_operand.vmem [shape: f32[8,4], index: 1, kind: input, shape index: {}]
  %s2 = inlined_call_operand.vmem [shape: f32[160,256], index: 2, kind: input, shape index: {}]
  %s3 = inlined_call_operand.vmem [shape: f32[504,1], index: 3, kind: input, shape index: {}]
  %s4 = inlined_call_operand.vmem [shape: f32[16,11], index: 4, kind: input, shape index: {}]
  %s5 = inlined_call_operand.vmem [shape: f32[2,1], index: 5, kind: output, shape index: {0}]
  %s6 = inlined_call_operand.hbm [shape: f32[2,10], index: 6, kind: output, shape index: {1}]
  %7 = xla_tuple %s5, %s6
  %s8 = sld [smem:[#allocation0]]
  $region38: #{discriminator_forward.1} parent=0
    _
  %s10 = ssub.s32 1, %s8
  %s11 = scalar_select 0, %s10, %s8
  $region1: #{discriminator_forward.1} parent=0
    #allocation2 [shape = 'u8[1024]{0}', space=vmem, size = 0x400, scoped, tag = 'output window, operand 1, single buffered']
    #allocation3 [shape = 's32[1]{0}', space=sflag, size = 0x4, scoped, tag = 'scoped memory for discriminator_forward.1']
    %12 = vsyncpa [#allocation3], 0
    // Predicated region
    $region2: #{discriminator_forward.1} parent=1 // pred_check
      _
    $region3: #{discriminator_forward.1} parent=1 // pred_check_branch
      %14 = sbr.rel (0) target = $region5
    $region4: #{discriminator_forward.1} parent=1 // pred_region
      _
    $region5: #{discriminator_forward.1} parent=1 // pred_fallthru
      _
    // Predicated region
    $region6: #{discriminator_forward.1} parent=1 // pred_check
      _
    $region7: #{discriminator_forward.1} parent=1 // pred_check_branch
      %16 = sbr.rel (0) target = $region9
    $region8: #{discriminator_forward.1} parent=1 // pred_region
      _
    $region9: #{discriminator_forward.1} parent=1 // pred_fallthru
      _
    // Predicated region
    $region10: #{discriminator_forward.1} parent=1 // pred_check
      _
    $region11: #{discriminator_forward.1} parent=1 // pred_check_branch
      %18 = sbr.rel (0) target = $region13
    $region12: #{discriminator_forward.1} parent=1 // pred_region
      _
    $region13: #{discriminator_forward.1} parent=1 // pred_fallthru
      _
    // Predicated region
    $region14: #{discriminator_forward.1} parent=1 // pred_check
      _
    $region15: #{discriminator_forward.1} parent=1 // pred_check_branch
      %20 = sbr.rel (0) target = $region17
    $region16: #{discriminator_forward.1} parent=1 // pred_region
      _
    $region17: #{discriminator_forward.1} parent=1 // pred_fallthru
      _
    // Predicated region
    $region18: #{discriminator_forward.1} parent=1 // pred_check
      _
    $region19: #{discriminator_forward.1} parent=1 // pred_check_branch
      %22 = sbr.rel (0) target = $region21
    $region20: #{discriminator_forward.1} parent=1 // pred_region
      _
    $region21: #{discriminator_forward.1} parent=1 // pred_fallthru
      _
    %v23 = vld [vmem:[%s0] sm:$0xff]
    %v24 = vld [vmem:[%s0 + $0x8] sm:$0xff]
    %v25 = vld [vmem:[%s0 + $0x10] sm:$0xff]
    %v26 = vld [vmem:[%s0 + $0x18] sm:$0xff]
    %v27 = vld [vmem:[%s0 + $0x20] sm:$0xff]
    %v28 = vld [vmem:[%s0 + $0x28] sm:$0xff]
    %v29 = vld [vmem:[%s0 + $0x30] sm:$0xff]
    %v30 = vld [vmem:[%s0 + $0x38] sm:$0xff]
    %v31 = vld [vmem:[%s1] sm:$0xff]
    %33 = vset.pattern.permute.xlu0 0
    %34 = vperm.xlu0 %33, %v31
    %v35 = vpop.permute.xlu0 %34
    %v45 = vperm.slane %v23, 0
    %v46 = vperm.slane %v23, 4
    %v47 = vperm.slane %v24, 0
    %v48 = vperm.slane %v24, 4
    %v49 = vperm.slane %v25, 0
    %v50 = vperm.slane %v25, 4
    %v51 = vperm.slane %v26, 0
    %v52 = vperm.slane %v26, 4
    %v53 = vperm.slane %v27, 0
    %v54 = vperm.slane %v27, 4
    %v55 = vperm.slane %v28, 0
    %v56 = vperm.slane %v28, 4
    %v57 = vperm.slane %v29, 0
    %v58 = vperm.slane %v29, 4
    %v59 = vperm.slane %v30, 0
    %v60 = vperm.slane %v30, 4
    %v77 = vperm.slane %v45, 0
    %v78 = vperm.slane %v46, 0
    %v79 = vperm.slane %v47, 0
    %v80 = vperm.slane %v48, 0
    %v81 = vperm.slane %v49, 0
    %v82 = vperm.slane %v50, 0
    %v83 = vperm.slane %v51, 0
    %v84 = vperm.slane %v52, 0
    %v85 = vperm.slane %v53, 0
    %v86 = vperm.slane %v54, 0
    %v87 = vperm.slane %v55, 0
    %v88 = vperm.slane %v56, 0
    %v89 = vperm.slane %v57, 0
    %v90 = vperm.slane %v58, 0
    %v91 = vperm.slane %v59, 0
    %v92 = vperm.slane %v60, 0
    %v93 = vmul.f32 %v35, %v77
    %v94 = vmul.f32 %v35, %v78
    %v95 = vmul.f32 %v35, %v79
    %v96 = vmul.f32 %v35, %v80
    %v97 = vmul.f32 %v35, %v81
    %v98 = vmul.f32 %v35, %v82
    %v99 = vmul.f32 %v35, %v83
    %v100 = vmul.f32 %v35, %v84
    %v101 = vmul.f32 %v35, %v85
    %v102 = vmul.f32 %v35, %v86
    %v103 = vmul.f32 %v35, %v87
    %v104 = vmul.f32 %v35, %v88
    %v105 = vmul.f32 %v35, %v89
    %v106 = vmul.f32 %v35, %v90
    %v107 = vmul.f32 %v35, %v91
    %v108 = vmul.f32 %v35, %v92
    %109 = vset.pattern.permute.xlu0 1
    %110 = vperm.xlu0 %109, %v31
    %v111 = vpop.permute.xlu0 %110
    %v113 = vperm.slane %v23, 1
    %v114 = vperm.slane %v23, 5
    %v115 = vperm.slane %v24, 1
    %v116 = vperm.slane %v24, 5
    %v117 = vperm.slane %v25, 1
    %v118 = vperm.slane %v25, 5
    %v119 = vperm.slane %v26, 1
    %v120 = vperm.slane %v26, 5
    %v121 = vperm.slane %v27, 1
    %v122 = vperm.slane %v27, 5
    %v123 = vperm.slane %v28, 1
    %v124 = vperm.slane %v28, 5
    %v125 = vperm.slane %v29, 1
    %v126 = vperm.slane %v29, 5
    %v127 = vperm.slane %v30, 1
    %v128 = vperm.slane %v30, 5
    %v145 = vperm.slane %v113, 1
    %v146 = vperm.slane %v114, 1
    %v147 = vperm.slane %v115, 1
    %v148 = vperm.slane %v116, 1
    %v149 = vperm.slane %v117, 1
    %v150 = vperm.slane %v118, 1
    %v151 = vperm.slane %v119, 1
    %v152 = vperm.slane %v120, 1
    %v153 = vperm.slane %v121, 1
    %v154 = vperm.slane %v122, 1
    %v155 = vperm.slane %v123, 1
    %v156 = vperm.slane %v124, 1
    %v157 = vperm.slane %v125, 1
    %v158 = vperm.slane %v126, 1
    %v159 = vperm.slane %v127, 1
    %v160 = vperm.slane %v128, 1
    %v161 = vmul.f32 %v111, %v145
    %v162 = vmul.f32 %v111, %v146
    %v163 = vmul.f32 %v111, %v147
    %v164 = vmul.f32 %v111, %v148
    %v165 = vmul.f32 %v111, %v149
    %v166 = vmul.f32 %v111, %v150
    %v167 = vmul.f32 %v111, %v151
    %v168 = vmul.f32 %v111, %v152
    %v169 = vmul.f32 %v111, %v153
    %v170 = vmul.f32 %v111, %v154
    %v171 = vmul.f32 %v111, %v155
    %v172 = vmul.f32 %v111, %v156
    %v173 = vmul.f32 %v111, %v157
    %v174 = vmul.f32 %v111, %v158
    %v175 = vmul.f32 %v111, %v159
    %v176 = vmul.f32 %v111, %v160
    %v177 = vadd.f32 %v93, %v161
    %v178 = vadd.f32 %v94, %v162
    %v179 = vadd.f32 %v95, %v163
    %v180 = vadd.f32 %v96, %v164
    %v181 = vadd.f32 %v97, %v165
    %v182 = vadd.f32 %v98, %v166
    %v183 = vadd.f32 %v99, %v167
    %v184 = vadd.f32 %v100, %v168
    %v185 = vadd.f32 %v101, %v169
    %v186 = vadd.f32 %v102, %v170
    %v187 = vadd.f32 %v103, %v171
    %v188 = vadd.f32 %v104, %v172
    %v189 = vadd.f32 %v105, %v173
    %v190 = vadd.f32 %v106, %v174
    %v191 = vadd.f32 %v107, %v175
    %v192 = vadd.f32 %v108, %v176
    %193 = vset.pattern.permute.xlu0 2
    %194 = vperm.xlu0 %193, %v31
    %v195 = vpop.permute.xlu0 %194
    %v197 = vperm.slane %v23, 2
    %v198 = vperm.slane %v23, 6
    %v199 = vperm.slane %v24, 2
    %v200 = vperm.slane %v24, 6
    %v201 = vperm.slane %v25, 2
    %v202 = vperm.slane %v25, 6
    %v203 = vperm.slane %v26, 2
    %v204 = vperm.slane %v26, 6
    %v205 = vperm.slane %v27, 2
    %v206 = vperm.slane %v27, 6
    %v207 = vperm.slane %v28, 2
    %v208 = vperm.slane %v28, 6
    %v209 = vperm.slane %v29, 2
    %v210 = vperm.slane %v29, 6
    %v211 = vperm.slane %v30, 2
    %v212 = vperm.slane %v30, 6
    %v229 = vperm.slane %v197, 2
    %v230 = vperm.slane %v198, 2
    %v231 = vperm.slane %v199, 2
    %v232 = vperm.slane %v200, 2
    %v233 = vperm.slane %v201, 2
    %v234 = vperm.slane %v202, 2
    %v235 = vperm.slane %v203, 2
    %v236 = vperm.slane %v204, 2
    %v237 = vperm.slane %v205, 2
    %v238 = vperm.slane %v206, 2
    %v239 = vperm.slane %v207, 2
    %v240 = vperm.slane %v208, 2
    %v241 = vperm.slane %v209, 2
    %v242 = vperm.slane %v210, 2
    %v243 = vperm.slane %v211, 2
    %v244 = vperm.slane %v212, 2
    %v245 = vmul.f32 %v195, %v229
    %v246 = vmul.f32 %v195, %v230
    %v247 = vmul.f32 %v195, %v231
    %v248 = vmul.f32 %v195, %v232
    %v249 = vmul.f32 %v195, %v233
    %v250 = vmul.f32 %v195, %v234
    %v251 = vmul.f32 %v195, %v235
    %v252 = vmul.f32 %v195, %v236
    %v253 = vmul.f32 %v195, %v237
    %v254 = vmul.f32 %v195, %v238
    %v255 = vmul.f32 %v195, %v239
    %v256 = vmul.f32 %v195, %v240
    %v257 = vmul.f32 %v195, %v241
    %v258 = vmul.f32 %v195, %v242
    %v259 = vmul.f32 %v195, %v243
    %v260 = vmul.f32 %v195, %v244
    %v261 = vadd.f32 %v177, %v245
    %v262 = vadd.f32 %v178, %v246
    %v263 = vadd.f32 %v179, %v247
    %v264 = vadd.f32 %v180, %v248
    %v265 = vadd.f32 %v181, %v249
    %v266 = vadd.f32 %v182, %v250
    %v267 = vadd.f32 %v183, %v251
    %v268 = vadd.f32 %v184, %v252
    %v269 = vadd.f32 %v185, %v253
    %v270 = vadd.f32 %v186, %v254
    %v271 = vadd.f32 %v187, %v255
    %v272 = vadd.f32 %v188, %v256
    %v273 = vadd.f32 %v189, %v257
    %v274 = vadd.f32 %v190, %v258
    %v275 = vadd.f32 %v191, %v259
    %v276 = vadd.f32 %v192, %v260
    %277 = vset.pattern.permute.xlu0 3
    %278 = vperm.xlu0 %277, %v31
    %v279 = vpop.permute.xlu0 %278
    %v281 = vperm.slane %v23, 3
    %v282 = vperm.slane %v23, 7
    %v283 = vperm.slane %v24, 3
    %v284 = vperm.slane %v24, 7
    %v285 = vperm.slane %v25, 3
    %v286 = vperm.slane %v25, 7
    %v287 = vperm.slane %v26, 3
    %v288 = vperm.slane %v26, 7
    %v289 = vperm.slane %v27, 3
    %v290 = vperm.slane %v27, 7
    %v291 = vperm.slane %v28, 3
    %v292 = vperm.slane %v28, 7
    %v293 = vperm.slane %v29, 3
    %v294 = vperm.slane %v29, 7
    %v295 = vperm.slane %v30, 3
    %v296 = vperm.slane %v30, 7
    %v313 = vperm.slane %v281, 3
    %v314 = vperm.slane %v282, 3
    %v315 = vperm.slane %v283, 3
    %v316 = vperm.slane %v284, 3
    %v317 = vperm.slane %v285, 3
    %v318 = vperm.slane %v286, 3
    %v319 = vperm.slane %v287, 3
    %v320 = vperm.slane %v288, 3
    %v321 = vperm.slane %v289, 3
    %v322 = vperm.slane %v290, 3
    %v323 = vperm.slane %v291, 3
    %v324 = vperm.slane %v292, 3
    %v325 = vperm.slane %v293, 3
    %v326 = vperm.slane %v294, 3
    %v327 = vperm.slane %v295, 3
    %v328 = vperm.slane %v296, 3
    %v329 = vmul.f32 %v279, %v313
    %v330 = vmul.f32 %v279, %v314
    %v331 = vmul.f32 %v279, %v315
    %v332 = vmul.f32 %v279, %v316
    %v333 = vmul.f32 %v279, %v317
    %v334 = vmul.f32 %v279, %v318
    %v335 = vmul.f32 %v279, %v319
    %v336 = vmul.f32 %v279, %v320
    %v337 = vmul.f32 %v279, %v321
    %v338 = vmul.f32 %v279, %v322
    %v339 = vmul.f32 %v279, %v323
    %v340 = vmul.f32 %v279, %v324
    %v341 = vmul.f32 %v279, %v325
    %v342 = vmul.f32 %v279, %v326
    %v343 = vmul.f32 %v279, %v327
    %v344 = vmul.f32 %v279, %v328
    %v345 = vadd.f32 %v261, %v329
    %v346 = vadd.f32 %v262, %v330
    %v347 = vadd.f32 %v263, %v331
    %v348 = vadd.f32 %v264, %v332
    %v349 = vadd.f32 %v265, %v333
    %v350 = vadd.f32 %v266, %v334
    %v351 = vadd.f32 %v267, %v335
    %v352 = vadd.f32 %v268, %v336
    %v353 = vadd.f32 %v269, %v337
    %v354 = vadd.f32 %v270, %v338
    %v355 = vadd.f32 %v271, %v339
    %v356 = vadd.f32 %v272, %v340
    %v357 = vadd.f32 %v273, %v341
    %v358 = vadd.f32 %v274, %v342
    %v359 = vadd.f32 %v275, %v343
    %v360 = vadd.f32 %v276, %v344
    %v361 = vld [vmem:[%s3] sm:$0xff]
    %v362 = vld [vmem:[%s3 + $0xa8] sm:$0xff]
    %v363 = vld [vmem:[%s3 + $0x150] sm:$0xff]
    %365 = vset.pattern.permute.xlu0 0
    %366 = vperm.xlu0 %365, %v361
    %v367 = vpop.permute.xlu0 %366
    %v369 = vadd.f32 %v345, %v367
    %v370 = vadd.f32 %v346, %v367
    %v371 = vadd.f32 %v347, %v367
    %v372 = vadd.f32 %v348, %v367
    %v373 = vadd.f32 %v349, %v367
    %v374 = vadd.f32 %v350, %v367
    %v375 = vadd.f32 %v351, %v367
    %v376 = vadd.f32 %v352, %v367
    %v377 = vadd.f32 %v353, %v367
    %v378 = vadd.f32 %v354, %v367
    %v379 = vadd.f32 %v355, %v367
    %v380 = vadd.f32 %v356, %v367
    %v381 = vadd.f32 %v357, %v367
    %v382 = vadd.f32 %v358, %v367
    %v383 = vadd.f32 %v359, %v367
    %v384 = vadd.f32 %v360, %v367
    %v385 = vadd.f32 %v369, %v370
    %v386 = vadd.f32 %v385, %v371
    %v387 = vadd.f32 %v386, %v372
    %v388 = vadd.f32 %v387, %v373
    %v389 = vadd.f32 %v388, %v374
    %v390 = vadd.f32 %v389, %v375
    %v391 = vadd.f32 %v390, %v376
    %v392 = vadd.f32 %v391, %v377
    %v393 = vadd.f32 %v392, %v378
    %v394 = vadd.f32 %v393, %v379
    %v395 = vadd.f32 %v394, %v380
    %v396 = vadd.f32 %v395, %v381
    %v397 = vadd.f32 %v396, %v382
    %v398 = vadd.f32 %v397, %v383
    %v399 = vadd.f32 %v398, %v384
    %400 = vadd.xlane.f32.xlu0 %v399
    %v401 = vpop.xlane.xlu0 %400
    %v402 = vrcp.pop 2048.0
    %v403 = vmul.f32 2048.0, %v402
    %v404 = vsub.f32 1.0, %v403
    %v405 = vmul.f32 %v402, %v404
    %v406 = vadd.f32 %v402, %v405
    %vm407 = vweird.f32 %v402
    %v408 = vsel %vm407, %v402, %v406
    %v409 = vmul.f32 %v401, %v408
    %v410 = vsub.f32 %v369, %v409
    %v411 = vsub.f32 %v370, %v409
    %v412 = vsub.f32 %v371, %v409
    %v413 = vsub.f32 %v372, %v409
    %v414 = vsub.f32 %v373, %v409
    %v415 = vsub.f32 %v374, %v409
    %v416 = vsub.f32 %v375, %v409
    %v417 = vsub.f32 %v376, %v409
    %v418 = vsub.f32 %v377, %v409
    %v419 = vsub.f32 %v378, %v409
    %v420 = vsub.f32 %v379, %v409
    %v421 = vsub.f32 %v380, %v409
    %v422 = vsub.f32 %v381, %v409
    %v423 = vsub.f32 %v382, %v409
    %v424 = vsub.f32 %v383, %v409
    %v425 = vsub.f32 %v384, %v409
    %v426 = vmul.f32 %v410, %v410
    %v427 = vmul.f32 %v411, %v411
    %v428 = vmul.f32 %v412, %v412
    %v429 = vmul.f32 %v413, %v413
    %v430 = vmul.f32 %v414, %v414
    %v431 = vmul.f32 %v415, %v415
    %v432 = vmul.f32 %v416, %v416
    %v433 = vmul.f32 %v417, %v417
    %v434 = vmul.f32 %v418, %v418
    %v435 = vmul.f32 %v419, %v419
    %v436 = vmul.f32 %v420, %v420
    %v437 = vmul.f32 %v421, %v421
    %v438 = vmul.f32 %v422, %v422
    %v439 = vmul.f32 %v423, %v423
    %v440 = vmul.f32 %v424, %v424
    %v441 = vmul.f32 %v425, %v425
    %v442 = vadd.f32 %v426, %v427
    %v443 = vadd.f32 %v442, %v428
    %v444 = vadd.f32 %v443, %v429
    %v445 = vadd.f32 %v444, %v430
    %v446 = vadd.f32 %v445, %v431
    %v447 = vadd.f32 %v446, %v432
    %v448 = vadd.f32 %v447, %v433
    %v449 = vadd.f32 %v448, %v434
    %v450 = vadd.f32 %v449, %v435
    %v451 = vadd.f32 %v450, %v436
    %v452 = vadd.f32 %v451, %v437
    %v453 = vadd.f32 %v452, %v438
    %v454 = vadd.f32 %v453, %v439
    %v455 = vadd.f32 %v454, %v440
    %v456 = vadd.f32 %v455, %v441
    %457 = vadd.xlane.f32.xlu0 %v456
    %v458 = vpop.xlane.xlu0 %457
    %v459 = vmul.f32 %v458, %v408
    %v460 = vadd.f32 %v459, 1e-05
    %v461 = vrsqrt.pop %v460
    %v462 = vmul.f32 %v461, %v460
    %v463 = vmul.f32 %v462, %v461
    %v464 = vmul.f32 0.5, %v463
    %v465 = vsub.f32 1.5, %v464
    %v466 = vmul.f32 %v461, %v465
    %vm467 = vweird.f32 %v460
    %vm468 = vweird.f32 %v461
    %vm469 = vmor %vm467, %vm468
    %v470 = vsel %vm469, %v461, %v466
    %v471 = vmul.f32 %v410, %v470
    %v472 = vmul.f32 %v411, %v470
    %v473 = vmul.f32 %v412, %v470
    %v474 = vmul.f32 %v413, %v470
    %v475 = vmul.f32 %v414, %v470
    %v476 = vmul.f32 %v415, %v470
    %v477 = vmul.f32 %v416, %v470
    %v478 = vmul.f32 %v417, %v470
    %v479 = vmul.f32 %v418, %v470
    %v480 = vmul.f32 %v419, %v470
    %v481 = vmul.f32 %v420, %v470
    %v482 = vmul.f32 %v421, %v470
    %v483 = vmul.f32 %v422, %v470
    %v484 = vmul.f32 %v423, %v470
    %v485 = vmul.f32 %v424, %v470
    %v486 = vmul.f32 %v425, %v470
    %488 = vset.pattern.permute.xlu0 0
    %489 = vperm.xlu0 %488, %v362
    %v490 = vpop.permute.xlu0 %489
    %v492 = vmul.f32 %v471, %v490
    %v493 = vmul.f32 %v472, %v490
    %v494 = vmul.f32 %v473, %v490
    %v495 = vmul.f32 %v474, %v490
    %v496 = vmul.f32 %v475, %v490
    %v497 = vmul.f32 %v476, %v490
    %v498 = vmul.f32 %v477, %v490
    %v499 = vmul.f32 %v478, %v490
    %v500 = vmul.f32 %v479, %v490
    %v501 = vmul.f32 %v480, %v490
    %v502 = vmul.f32 %v481, %v490
    %v503 = vmul.f32 %v482, %v490
    %v504 = vmul.f32 %v483, %v490
    %v505 = vmul.f32 %v484, %v490
    %v506 = vmul.f32 %v485, %v490
    %v507 = vmul.f32 %v486, %v490
    %509 = vset.pattern.permute.xlu0 0
    %510 = vperm.xlu0 %509, %v363
    %v511 = vpop.permute.xlu0 %510
    %v513 = vadd.f32 %v492, %v511
    %v514 = vadd.f32 %v493, %v511
    %v515 = vadd.f32 %v494, %v511
    %v516 = vadd.f32 %v495, %v511
    %v517 = vadd.f32 %v496, %v511
    %v518 = vadd.f32 %v497, %v511
    %v519 = vadd.f32 %v498, %v511
    %v520 = vadd.f32 %v499, %v511
    %v521 = vadd.f32 %v500, %v511
    %v522 = vadd.f32 %v501, %v511
    %v523 = vadd.f32 %v502, %v511
    %v524 = vadd.f32 %v503, %v511
    %v525 = vadd.f32 %v504, %v511
    %v526 = vadd.f32 %v505, %v511
    %v527 = vadd.f32 %v506, %v511
    %v528 = vadd.f32 %v507, %v511
    %v529 = vmax.f32 %v513, 0.0
    %v530 = vmax.f32 %v514, 0.0
    %v531 = vmax.f32 %v515, 0.0
    %v532 = vmax.f32 %v516, 0.0
    %v533 = vmax.f32 %v517, 0.0
    %v534 = vmax.f32 %v518, 0.0
    %v535 = vmax.f32 %v519, 0.0
    %v536 = vmax.f32 %v520, 0.0
    %v537 = vmax.f32 %v521, 0.0
    %v538 = vmax.f32 %v522, 0.0
    %v539 = vmax.f32 %v523, 0.0
    %v540 = vmax.f32 %v524, 0.0
    %v541 = vmax.f32 %v525, 0.0
    %v542 = vmax.f32 %v526, 0.0
    %v543 = vmax.f32 %v527, 0.0
    %v544 = vmax.f32 %v528, 0.0
    %v545 = vld [vmem:[%s2] sm:$0xff]
    %v546 = vld [vmem:[%s2 + $0x10] sm:$0xff]
    %v547 = vld [vmem:[%s3 + $0x8] sm:$0xff]
    %v548 = vld [vmem:[%s3 + $0x10] sm:$0xff]
    %v549 = vld [vmem:[%s3 + $0xb0] sm:$0xff]
    %v550 = vld [vmem:[%s3 + $0xb8] sm:$0xff]
    %v551 = vld [vmem:[%s3 + $0x158] sm:$0xff]
    %v552 = vld [vmem:[%s3 + $0x160] sm:$0xff]
    %554 = vset.pattern.permute.xlu0 0
    %555 = vperm.xlu0 %554, %v547
    %v556 = vpop.permute.xlu0 %555
    %559 = vset.pattern.permute.xlu0 0
    %560 = vperm.xlu0 %559, %v548
    %v561 = vpop.permute.xlu0 %560
    %vm563 = vcmask 261120
    %v565 = vsel %vm563, %v545, 0
    %v568 = vsel %vm563, %v546, 0
    %570 = vmatpush.msra.mxu0 0.0
    %571 = vmatpush.msra.mxu0 0.0
    %572 = vmatpush.msra.mxu0 0.0
    %573 = vmatpush.msra.mxu0 0.0
    %574 = vmatpush.msra.mxu0 0.0
    %575 = vmatpush.msra.mxu0 0.0
    %576 = vmatpush.msra.mxu0 0.0
    %577 = vmatpush.msra.mxu0 0.0
    %578 = vmatpush.msra.mxu0 0.0
    %579 = vmatpush.msra.mxu0 0.0
    %580 = vmatpush.msra.mxu0 0.0
    %581 = vmatpush.msra.mxu0 0.0
    %582 = vmatpush.msra.mxu0 %v541
    %583 = vmatpush.msra.mxu0 %v537
    %584 = vmatpush.msra.mxu0 %v533
    %585 = vmatpush.msra.mxu0 %v529
    %586 = vmatmul.f32.gmra.mxu0 %v565
    %v587 = vpop.f32.mrf.mxu0
    %v588 = vadd.f32 %v556, %v587
    %589 = vmatmul.f32.gmra.mxu0 %v568
    %v590 = vpop.f32.mrf.mxu0
    %v591 = vadd.f32 %v561, %v590
    %592 = vdwg.mxu0
    %593 = vmatpush.msra.mxu0 0.0
    %594 = vmatpush.msra.mxu0 0.0
    %595 = vmatpush.msra.mxu0 0.0
    %596 = vmatpush.msra.mxu0 0.0
    %597 = vmatpush.msra.mxu0 0.0
    %598 = vmatpush.msra.mxu0 0.0
    %599 = vmatpush.msra.mxu0 0.0
    %600 = vmatpush.msra.mxu0 0.0
    %601 = vmatpush.msra.mxu0 0.0
    %602 = vmatpush.msra.mxu0 0.0
    %603 = vmatpush.msra.mxu0 0.0
    %604 = vmatpush.msra.mxu0 0.0
    %605 = vmatpush.msra.mxu0 %v542
    %606 = vmatpush.msra.mxu0 %v538
    %607 = vmatpush.msra.mxu0 %v534
    %608 = vmatpush.msra.mxu0 %v530
    %609 = vmatmul.f32.gmra.mxu0 %v565
    %v610 = vpop.f32.mrf.mxu0
    %v611 = vadd.f32 %v556, %v610
    %612 = vmatmul.f32.gmra.mxu0 %v568
    %v613 = vpop.f32.mrf.mxu0
    %v614 = vadd.f32 %v561, %v613
    %615 = vdwg.mxu0
    %616 = vmatpush.msra.mxu0 0.0
    %617 = vmatpush.msra.mxu0 0.0
    %618 = vmatpush.msra.mxu0 0.0
    %619 = vmatpush.msra.mxu0 0.0
    %620 = vmatpush.msra.mxu0 0.0
    %621 = vmatpush.msra.mxu0 0.0
    %622 = vmatpush.msra.mxu0 0.0
    %623 = vmatpush.msra.mxu0 0.0
    %624 = vmatpush.msra.mxu0 0.0
    %625 = vmatpush.msra.mxu0 0.0
    %626 = vmatpush.msra.mxu0 0.0
    %627 = vmatpush.msra.mxu0 0.0
    %628 = vmatpush.msra.mxu0 %v543
    %629 = vmatpush.msra.mxu0 %v539
    %630 = vmatpush.msra.mxu0 %v535
    %631 = vmatpush.msra.mxu0 %v531
    %632 = vmatmul.f32.gmra.mxu0 %v565
    %v633 = vpop.f32.mrf.mxu0
    %v634 = vadd.f32 %v556, %v633
    %635 = vmatmul.f32.gmra.mxu0 %v568
    %v636 = vpop.f32.mrf.mxu0
    %v637 = vadd.f32 %v561, %v636
    %638 = vdwg.mxu0
    %639 = vmatpush.msra.mxu0 0.0
    %640 = vmatpush.msra.mxu0 0.0
    %641 = vmatpush.msra.mxu0 0.0
    %642 = vmatpush.msra.mxu0 0.0
    %643 = vmatpush.msra.mxu0 0.0
    %644 = vmatpush.msra.mxu0 0.0
    %645 = vmatpush.msra.mxu0 0.0
    %646 = vmatpush.msra.mxu0 0.0
    %647 = vmatpush.msra.mxu0 0.0
    %648 = vmatpush.msra.mxu0 0.0
    %649 = vmatpush.msra.mxu0 0.0
    %650 = vmatpush.msra.mxu0 0.0
    %651 = vmatpush.msra.mxu0 %v544
    %652 = vmatpush.msra.mxu0 %v540
    %653 = vmatpush.msra.mxu0 %v536
    %654 = vmatpush.msra.mxu0 %v532
    %655 = vmatmul.f32.gmra.mxu0 %v565
    %v656 = vpop.f32.mrf.mxu0
    %v657 = vadd.f32 %v556, %v656
    %658 = vmatmul.f32.gmra.mxu0 %v568
    %v659 = vpop.f32.mrf.mxu0
    %v660 = vadd.f32 %v561, %v659
    %661 = vdwg.mxu0
    %v662 = vadd.f32 %v588, %v611
    %v663 = vadd.f32 %v662, %v634
    %v664 = vadd.f32 %v663, %v657
    %665 = vadd.xlane.f32.xlu0 %v664
    %v666 = vpop.xlane.xlu0 %665
    %v667 = vadd.f32 %v591, %v614
    %v668 = vadd.f32 %v667, %v637
    %v669 = vadd.f32 %v668, %v660
    %670 = vadd.xlane.f32.xlu0 %v669
    %v671 = vpop.xlane.xlu0 %670
    %v672 = vrcp.pop 512.0
    %v673 = vmul.f32 512.0, %v672
    %v674 = vsub.f32 1.0, %v673
    %v675 = vmul.f32 %v672, %v674
    %v676 = vadd.f32 %v672, %v675
    %vm677 = vweird.f32 %v672
    %v678 = vsel %vm677, %v672, %v676
    %v679 = vmul.f32 %v666, %v678
    %v680 = vmul.f32 %v671, %v678
    %v681 = vsub.f32 %v588, %v679
    %v682 = vsub.f32 %v611, %v679
    %v683 = vsub.f32 %v634, %v679
    %v684 = vsub.f32 %v657, %v679
    %v685 = vsub.f32 %v591, %v680
    %v686 = vsub.f32 %v614, %v680
    %v687 = vsub.f32 %v637, %v680
    %v688 = vsub.f32 %v660, %v680
    %v689 = vmul.f32 %v681, %v681
    %v690 = vmul.f32 %v682, %v682
    %v691 = vmul.f32 %v683, %v683
    %v692 = vmul.f32 %v684, %v684
    %v693 = vmul.f32 %v685, %v685
    %v694 = vmul.f32 %v686, %v686
    %v695 = vmul.f32 %v687, %v687
    %v696 = vmul.f32 %v688, %v688
    %v697 = vadd.f32 %v689, %v690
    %v698 = vadd.f32 %v697, %v691
    %v699 = vadd.f32 %v698, %v692
    %700 = vadd.xlane.f32.xlu0 %v699
    %v701 = vpop.xlane.xlu0 %700
    %v702 = vadd.f32 %v693, %v694
    %v703 = vadd.f32 %v702, %v695
    %v704 = vadd.f32 %v703, %v696
    %705 = vadd.xlane.f32.xlu0 %v704
    %v706 = vpop.xlane.xlu0 %705
    %v707 = vmul.f32 %v701, %v678
    %v708 = vmul.f32 %v706, %v678
    %v709 = vadd.f32 %v707, 1e-05
    %v710 = vadd.f32 %v708, 1e-05
    %v711 = vrsqrt.pop %v709
    %v712 = vmul.f32 %v711, %v709
    %v713 = vmul.f32 %v712, %v711
    %v714 = vmul.f32 0.5, %v713
    %v715 = vsub.f32 1.5, %v714
    %v716 = vmul.f32 %v711, %v715
    %vm717 = vweird.f32 %v709
    %vm718 = vweird.f32 %v711
    %vm719 = vmor %vm717, %vm718
    %v720 = vsel %vm719, %v711, %v716
    %v721 = vrsqrt.pop %v710
    %v722 = vmul.f32 %v721, %v710
    %v723 = vmul.f32 %v722, %v721
    %v724 = vmul.f32 0.5, %v723
    %v725 = vsub.f32 1.5, %v724
    %v726 = vmul.f32 %v721, %v725
    %vm727 = vweird.f32 %v710
    %vm728 = vweird.f32 %v721
    %vm729 = vmor %vm727, %vm728
    %v730 = vsel %vm729, %v721, %v726
    %v731 = vmul.f32 %v681, %v720
    %v732 = vmul.f32 %v682, %v720
    %v733 = vmul.f32 %v683, %v720
    %v734 = vmul.f32 %v684, %v720
    %v735 = vmul.f32 %v685, %v730
    %v736 = vmul.f32 %v686, %v730
    %v737 = vmul.f32 %v687, %v730
    %v738 = vmul.f32 %v688, %v730
    %740 = vset.pattern.permute.xlu0 0
    %741 = vperm.xlu0 %740, %v549
    %v742 = vpop.permute.xlu0 %741
    %745 = vset.pattern.permute.xlu0 0
    %746 = vperm.xlu0 %745, %v550
    %v747 = vpop.permute.xlu0 %746
    %v749 = vmul.f32 %v731, %v742
    %v750 = vmul.f32 %v732, %v742
    %v751 = vmul.f32 %v733, %v742
    %v752 = vmul.f32 %v734, %v742
    %v753 = vmul.f32 %v735, %v747
    %v754 = vmul.f32 %v736, %v747
    %v755 = vmul.f32 %v737, %v747
    %v756 = vmul.f32 %v738, %v747
    %758 = vset.pattern.permute.xlu0 0
    %759 = vperm.xlu0 %758, %v551
    %v760 = vpop.permute.xlu0 %759
    %763 = vset.pattern.permute.xlu0 0
    %764 = vperm.xlu0 %763, %v552
    %v765 = vpop.permute.xlu0 %764
    %v767 = vadd.f32 %v749, %v760
    %v768 = vadd.f32 %v750, %v760
    %v769 = vadd.f32 %v751, %v760
    %v770 = vadd.f32 %v752, %v760
    %v771 = vadd.f32 %v753, %v765
    %v772 = vadd.f32 %v754, %v765
    %v773 = vadd.f32 %v755, %v765
    %v774 = vadd.f32 %v756, %v765
    %v775 = vmax.f32 %v767, 0.0
    %v776 = vmax.f32 %v768, 0.0
    %v777 = vmax.f32 %v769, 0.0
    %v778 = vmax.f32 %v770, 0.0
    %v779 = vmax.f32 %v771, 0.0
    %v780 = vmax.f32 %v772, 0.0
    %v781 = vmax.f32 %v773, 0.0
    %v782 = vmax.f32 %v774, 0.0
    %v783 = vld [vmem:[%s2 + $0x20] sm:$0xff]
    %v784 = vld [vmem:[%s2 + $0x30] sm:$0xff]
    %v785 = vld [vmem:[%s2 + $0x40] sm:$0xff]
    %v786 = vld [vmem:[%s2 + $0x50] sm:$0xff]
    %v787 = vld [vmem:[%s3 + $0x18] sm:$0xff]
    %v788 = vld [vmem:[%s3 + $0x20] sm:$0xff]
    %v789 = vld [vmem:[%s3 + $0x28] sm:$0xff]
    %v790 = vld [vmem:[%s3 + $0x30] sm:$0xff]
    %v791 = vld [vmem:[%s3 + $0xc0] sm:$0xff]
    %v792 = vld [vmem:[%s3 + $0xc8] sm:$0xff]
    %v793 = vld [vmem:[%s3 + $0xd0] sm:$0xff]
    %v794 = vld [vmem:[%s3 + $0xd8] sm:$0xff]
    %v795 = vld [vmem:[%s3 + $0x168] sm:$0xff]
    %v796 = vld [vmem:[%s3 + $0x170] sm:$0xff]
    %v797 = vld [vmem:[%s3 + $0x178] sm:$0xff]
    %v798 = vld [vmem:[%s3 + $0x180] sm:$0xff]
    %800 = vset.pattern.permute.xlu0 0
    %801 = vperm.xlu0 %800, %v787
    %v802 = vpop.permute.xlu0 %801
    %805 = vset.pattern.permute.xlu0 0
    %806 = vperm.xlu0 %805, %v788
    %v807 = vpop.permute.xlu0 %806
    %810 = vset.pattern.permute.xlu0 0
    %811 = vperm.xlu0 %810, %v789
    %v812 = vpop.permute.xlu0 %811
    %815 = vset.pattern.permute.xlu0 0
    %816 = vperm.xlu0 %815, %v790
    %v817 = vpop.permute.xlu0 %816
    %vm819 = vcmask 523264
    %v821 = vsel %vm819, %v783, 0
    %v824 = vsel %vm819, %v784, 0
    %v827 = vsel %vm819, %v785, 0
    %v830 = vsel %vm819, %v786, 0
    %832 = vmatpush.msra.mxu0 0.0
    %833 = vmatpush.msra.mxu0 0.0
    %834 = vmatpush.msra.mxu0 0.0
    %835 = vmatpush.msra.mxu0 0.0
    %836 = vmatpush.msra.mxu0 0.0
    %837 = vmatpush.msra.mxu0 0.0
    %838 = vmatpush.msra.mxu0 0.0
    %839 = vmatpush.msra.mxu0 0.0
    %840 = vmatpush.msra.mxu0 %v782
    %841 = vmatpush.msra.mxu0 %v778
    %842 = vmatpush.msra.mxu0 %v781
    %843 = vmatpush.msra.mxu0 %v777
    %844 = vmatpush.msra.mxu0 %v780
    %845 = vmatpush.msra.mxu0 %v776
    %846 = vmatpush.msra.mxu0 %v779
    %847 = vmatpush.msra.mxu0 %v775
    %848 = vmatmul.f32.gmra.mxu0 %v821
    %v849 = vpop.f32.mrf.mxu0
    %v850 = vadd.f32 %v802, %v849
    %851 = vmatmul.f32.gmra.mxu0 %v824
    %v852 = vpop.f32.mrf.mxu0
    %v853 = vadd.f32 %v807, %v852
    %854 = vmatmul.f32.gmra.mxu0 %v827
    %v855 = vpop.f32.mrf.mxu0
    %v856 = vadd.f32 %v812, %v855
    %857 = vmatmul.f32.gmra.mxu0 %v830
    %v858 = vpop.f32.mrf.mxu0
    %v859 = vadd.f32 %v817, %v858
    %860 = vdwg.mxu0
    %861 = vadd.xlane.f32.xlu0 %v850
    %v862 = vpop.xlane.xlu0 %861
    %863 = vadd.xlane.f32.xlu0 %v853
    %v864 = vpop.xlane.xlu0 %863
    %865 = vadd.xlane.f32.xlu0 %v856
    %v866 = vpop.xlane.xlu0 %865
    %867 = vadd.xlane.f32.xlu0 %v859
    %v868 = vpop.xlane.xlu0 %867
    %v869 = vrcp.pop 128.0
    %v870 = vmul.f32 128.0, %v869
    %v871 = vsub.f32 1.0, %v870
    %v872 = vmul.f32 %v869, %v871
    %v873 = vadd.f32 %v869, %v872
    %vm874 = vweird.f32 %v869
    %v875 = vsel %vm874, %v869, %v873
    %v876 = vmul.f32 %v862, %v875
    %v877 = vmul.f32 %v864, %v875
    %v878 = vmul.f32 %v866, %v875
    %v879 = vmul.f32 %v868, %v875
    %v880 = vsub.f32 %v850, %v876
    %v881 = vsub.f32 %v853, %v877
    %v882 = vsub.f32 %v856, %v878
    %v883 = vsub.f32 %v859, %v879
    %v884 = vmul.f32 %v880, %v880
    %v885 = vmul.f32 %v881, %v881
    %v886 = vmul.f32 %v882, %v882
    %v887 = vmul.f32 %v883, %v883
    %888 = vadd.xlane.f32.xlu0 %v884
    %v889 = vpop.xlane.xlu0 %888
    %890 = vadd.xlane.f32.xlu0 %v885
    %v891 = vpop.xlane.xlu0 %890
    %892 = vadd.xlane.f32.xlu0 %v886
    %v893 = vpop.xlane.xlu0 %892
    %894 = vadd.xlane.f32.xlu0 %v887
    %v895 = vpop.xlane.xlu0 %894
    %v896 = vmul.f32 %v889, %v875
    %v897 = vmul.f32 %v891, %v875
    %v898 = vmul.f32 %v893, %v875
    %v899 = vmul.f32 %v895, %v875
    %v900 = vadd.f32 %v896, 1e-05
    %v901 = vadd.f32 %v897, 1e-05
    %v902 = vadd.f32 %v898, 1e-05
    %v903 = vadd.f32 %v899, 1e-05
    %v904 = vrsqrt.pop %v900
    %v905 = vmul.f32 %v904, %v900
    %v906 = vmul.f32 %v905, %v904
    %v907 = vmul.f32 0.5, %v906
    %v908 = vsub.f32 1.5, %v907
    %v909 = vmul.f32 %v904, %v908
    %vm910 = vweird.f32 %v900
    %vm911 = vweird.f32 %v904
    %vm912 = vmor %vm910, %vm911
    %v913 = vsel %vm912, %v904, %v909
    %v914 = vrsqrt.pop %v901
    %v915 = vmul.f32 %v914, %v901
    %v916 = vmul.f32 %v915, %v914
    %v917 = vmul.f32 0.5, %v916
    %v918 = vsub.f32 1.5, %v917
    %v919 = vmul.f32 %v914, %v918
    %vm920 = vweird.f32 %v901
    %vm921 = vweird.f32 %v914
    %vm922 = vmor %vm920, %vm921
    %v923 = vsel %vm922, %v914, %v919
    %v924 = vrsqrt.pop %v902
    %v925 = vmul.f32 %v924, %v902
    %v926 = vmul.f32 %v925, %v924
    %v927 = vmul.f32 0.5, %v926
    %v928 = vsub.f32 1.5, %v927
    %v929 = vmul.f32 %v924, %v928
    %vm930 = vweird.f32 %v902
    %vm931 = vweird.f32 %v924
    %vm932 = vmor %vm930, %vm931
    %v933 = vsel %vm932, %v924, %v929
    %v934 = vrsqrt.pop %v903
    %v935 = vmul.f32 %v934, %v903
    %v936 = vmul.f32 %v935, %v934
    %v937 = vmul.f32 0.5, %v936
    %v938 = vsub.f32 1.5, %v937
    %v939 = vmul.f32 %v934, %v938
    %vm940 = vweird.f32 %v903
    %vm941 = vweird.f32 %v934
    %vm942 = vmor %vm940, %vm941
    %v943 = vsel %vm942, %v934, %v939
    %v944 = vmul.f32 %v880, %v913
    %v945 = vmul.f32 %v881, %v923
    %v946 = vmul.f32 %v882, %v933
    %v947 = vmul.f32 %v883, %v943
    %949 = vset.pattern.permute.xlu0 0
    %950 = vperm.xlu0 %949, %v791
    %v951 = vpop.permute.xlu0 %950
    %954 = vset.pattern.permute.xlu0 0
    %955 = vperm.xlu0 %954, %v792
    %v956 = vpop.permute.xlu0 %955
    %959 = vset.pattern.permute.xlu0 0
    %960 = vperm.xlu0 %959, %v793
    %v961 = vpop.permute.xlu0 %960
    %964 = vset.pattern.permute.xlu0 0
    %965 = vperm.xlu0 %964, %v794
    %v966 = vpop.permute.xlu0 %965
    %v968 = vmul.f32 %v944, %v951
    %v969 = vmul.f32 %v945, %v956
    %v970 = vmul.f32 %v946, %v961
    %v971 = vmul.f32 %v947, %v966
    %973 = vset.pattern.permute.xlu0 0
    %974 = vperm.xlu0 %973, %v795
    %v975 = vpop.permute.xlu0 %974
    %978 = vset.pattern.permute.xlu0 0
    %979 = vperm.xlu0 %978, %v796
    %v980 = vpop.permute.xlu0 %979
    %983 = vset.pattern.permute.xlu0 0
    %984 = vperm.xlu0 %983, %v797
    %v985 = vpop.permute.xlu0 %984
    %988 = vset.pattern.permute.xlu0 0
    %989 = vperm.xlu0 %988, %v798
    %v990 = vpop.permute.xlu0 %989
    %v992 = vadd.f32 %v968, %v975
    %v993 = vadd.f32 %v969, %v980
    %v994 = vadd.f32 %v970, %v985
    %v995 = vadd.f32 %v971, %v990
    %v996 = vmax.f32 %v992, 0.0
    %v997 = vmax.f32 %v993, 0.0
    %v998 = vmax.f32 %v994, 0.0
    %v999 = vmax.f32 %v995, 0.0
    %v1000 = vld [vmem:[%s2 + $0x60] sm:$0xff]
    %v1001 = vld [vmem:[%s2 + $0x70] sm:$0xff]
    %v1002 = vld [vmem:[%s2 + $0x80] sm:$0xff]
    %v1003 = vld [vmem:[%s2 + $0x90] sm:$0xff]
    %v1004 = vld [vmem:[%s2 + $0xa0] sm:$0xff]
    %v1005 = vld [vmem:[%s2 + $0xb0] sm:$0xff]
    %v1006 = vld [vmem:[%s2 + $0xc0] sm:$0xff]
    %v1007 = vld [vmem:[%s2 + $0xd0] sm:$0xff]
    %1012 = vrot.lane.b32.xlu0 %v996, 96
    %v1013 = vpop.permute.xlu0 %1012
    %1014 = vrot.lane.b32.xlu0 %v997, 96
    %v1015 = vpop.permute.xlu0 %1014
    %1016 = vrot.lane.b32.xlu0 %v998, 96
    %v1017 = vpop.permute.xlu0 %1016
    %1018 = vrot.lane.b32.xlu0 %v999, 96
    %v1019 = vpop.permute.xlu0 %1018
    %1024 = vrot.lane.b32.xlu0 %v996, 64
    %v1025 = vpop.permute.xlu0 %1024
    %1026 = vrot.lane.b32.xlu0 %v997, 64
    %v1027 = vpop.permute.xlu0 %1026
    %1028 = vrot.lane.b32.xlu0 %v998, 64
    %v1029 = vpop.permute.xlu0 %1028
    %1030 = vrot.lane.b32.xlu0 %v999, 64
    %v1031 = vpop.permute.xlu0 %1030
    %1036 = vrot.lane.b32.xlu0 %v996, 32
    %v1037 = vpop.permute.xlu0 %1036
    %1038 = vrot.lane.b32.xlu0 %v997, 32
    %v1039 = vpop.permute.xlu0 %1038
    %1040 = vrot.lane.b32.xlu0 %v998, 32
    %v1041 = vpop.permute.xlu0 %1040
    %1042 = vrot.lane.b32.xlu0 %v999, 32
    %v1043 = vpop.permute.xlu0 %1042
    %v1048 = vld [vmem:[%s3 + $0x38] sm:$0xff]
    %v1049 = vld [vmem:[%s3 + $0x40] sm:$0xff]
    %v1050 = vld [vmem:[%s3 + $0x48] sm:$0xff]
    %v1051 = vld [vmem:[%s3 + $0x50] sm:$0xff]
    %v1052 = vld [vmem:[%s3 + $0x58] sm:$0xff]
    %v1053 = vld [vmem:[%s3 + $0x60] sm:$0xff]
    %v1054 = vld [vmem:[%s3 + $0x68] sm:$0xff]
    %v1055 = vld [vmem:[%s3 + $0x70] sm:$0xff]
    %v1056 = vld [vmem:[%s3 + $0xe0] sm:$0xff]
    %v1057 = vld [vmem:[%s3 + $0xe8] sm:$0xff]
    %v1058 = vld [vmem:[%s3 + $0xf0] sm:$0xff]
    %v1059 = vld [vmem:[%s3 + $0xf8] sm:$0xff]
    %v1060 = vld [vmem:[%s3 + $0x100] sm:$0xff]
    %v1061 = vld [vmem:[%s3 + $0x108] sm:$0xff]
    %v1062 = vld [vmem:[%s3 + $0x110] sm:$0xff]
    %v1063 = vld [vmem:[%s3 + $0x118] sm:$0xff]
    %v1064 = vld [vmem:[%s3 + $0x188] sm:$0xff]
    %v1065 = vld [vmem:[%s3 + $0x190] sm:$0xff]
    %v1066 = vld [vmem:[%s3 + $0x198] sm:$0xff]
    %v1067 = vld [vmem:[%s3 + $0x1a0] sm:$0xff]
    %v1068 = vld [vmem:[%s3 + $0x1a8] sm:$0xff]
    %v1069 = vld [vmem:[%s3 + $0x1b0] sm:$0xff]
    %v1070 = vld [vmem:[%s3 + $0x1b8] sm:$0xff]
    %v1071 = vld [vmem:[%s3 + $0x1c0] sm:$0xff]
    %1073 = vset.pattern.permute.xlu0 0
    %1074 = vperm.xlu0 %1073, %v1048
    %v1075 = vpop.permute.xlu0 %1074
    %1078 = vset.pattern.permute.xlu0 0
    %1079 = vperm.xlu0 %1078, %v1049
    %v1080 = vpop.permute.xlu0 %1079
    %1083 = vset.pattern.permute.xlu0 0
    %1084 = vperm.xlu0 %1083, %v1050
    %v1085 = vpop.permute.xlu0 %1084
    %1088 = vset.pattern.permute.xlu0 0
    %1089 = vperm.xlu0 %1088, %v1051
    %v1090 = vpop.permute.xlu0 %1089
    %1093 = vset.pattern.permute.xlu0 0
    %1094 = vperm.xlu0 %1093, %v1052
    %v1095 = vpop.permute.xlu0 %1094
    %1098 = vset.pattern.permute.xlu0 0
    %1099 = vperm.xlu0 %1098, %v1053
    %v1100 = vpop.permute.xlu0 %1099
    %1103 = vset.pattern.permute.xlu0 0
    %1104 = vperm.xlu0 %1103, %v1054
    %v1105 = vpop.permute.xlu0 %1104
    %1108 = vset.pattern.permute.xlu0 0
    %1109 = vperm.xlu0 %1108, %v1055
    %v1110 = vpop.permute.xlu0 %1109
    %1112 = vmatpush.msra.mxu0 %v1043
    %1113 = vmatpush.msra.mxu0 %v1041
    %1114 = vmatpush.msra.mxu0 %v1039
    %1115 = vmatpush.msra.mxu0 %v1037
    %1116 = vmatpush.msra.mxu0 %v1031
    %1117 = vmatpush.msra.mxu0 %v1029
    %1118 = vmatpush.msra.mxu0 %v1027
    %1119 = vmatpush.msra.mxu0 %v1025
    %1120 = vmatpush.msra.mxu0 %v1019
    %1121 = vmatpush.msra.mxu0 %v1017
    %1122 = vmatpush.msra.mxu0 %v1015
    %1123 = vmatpush.msra.mxu0 %v1013
    %1124 = vmatpush.msra.mxu0 %v999
    %1125 = vmatpush.msra.mxu0 %v998
    %1126 = vmatpush.msra.mxu0 %v997
    %1127 = vmatpush.msra.mxu0 %v996
    %1128 = vmatmul.f32.gmra.mxu0 %v1000
    %v1129 = vpop.f32.mrf.mxu0
    %v1130 = vadd.f32 %v1075, %v1129
    %1131 = vmatmul.f32.gmra.mxu0 %v1001
    %v1132 = vpop.f32.mrf.mxu0
    %v1133 = vadd.f32 %v1080, %v1132
    %1134 = vmatmul.f32.gmra.mxu0 %v1002
    %v1135 = vpop.f32.mrf.mxu0
    %v1136 = vadd.f32 %v1085, %v1135
    %1137 = vmatmul.f32.gmra.mxu0 %v1003
    %v1138 = vpop.f32.mrf.mxu0
    %v1139 = vadd.f32 %v1090, %v1138
    %1140 = vmatmul.f32.gmra.mxu0 %v1004
    %v1141 = vpop.f32.mrf.mxu0
    %v1142 = vadd.f32 %v1095, %v1141
    %1143 = vmatmul.f32.gmra.mxu0 %v1005
    %v1144 = vpop.f32.mrf.mxu0
    %v1145 = vadd.f32 %v1100, %v1144
    %1146 = vmatmul.f32.gmra.mxu0 %v1006
    %v1147 = vpop.f32.mrf.mxu0
    %v1148 = vadd.f32 %v1105, %v1147
    %1149 = vmatmul.f32.gmra.mxu0 %v1007
    %v1150 = vpop.f32.mrf.mxu0
    %v1151 = vadd.f32 %v1110, %v1150
    %1152 = vdwg.mxu0
    %v1153 = vsel %vm563, %v1130, 0.0
    %1154 = vadd.xlane.f32.xlu0 %v1153
    %v1155 = vpop.xlane.xlu0 %1154
    %v1156 = vsel %vm563, %v1133, 0.0
    %1157 = vadd.xlane.f32.xlu0 %v1156
    %v1158 = vpop.xlane.xlu0 %1157
    %v1159 = vsel %vm563, %v1136, 0.0
    %1160 = vadd.xlane.f32.xlu0 %v1159
    %v1161 = vpop.xlane.xlu0 %1160
    %v1162 = vsel %vm563, %v1139, 0.0
    %1163 = vadd.xlane.f32.xlu0 %v1162
    %v1164 = vpop.xlane.xlu0 %1163
    %v1165 = vsel %vm563, %v1142, 0.0
    %1166 = vadd.xlane.f32.xlu0 %v1165
    %v1167 = vpop.xlane.xlu0 %1166
    %v1168 = vsel %vm563, %v1145, 0.0
    %1169 = vadd.xlane.f32.xlu0 %v1168
    %v1170 = vpop.xlane.xlu0 %1169
    %v1171 = vsel %vm563, %v1148, 0.0
    %1172 = vadd.xlane.f32.xlu0 %v1171
    %v1173 = vpop.xlane.xlu0 %1172
    %v1174 = vsel %vm563, %v1151, 0.0
    %1175 = vadd.xlane.f32.xlu0 %v1174
    %v1176 = vpop.xlane.xlu0 %1175
    %v1177 = vrcp.pop 32.0
    %v1178 = vmul.f32 32.0, %v1177
    %v1179 = vsub.f32 1.0, %v1178
    %v1180 = vmul.f32 %v1177, %v1179
    %v1181 = vadd.f32 %v1177, %v1180
    %vm1182 = vweird.f32 %v1177
    %v1183 = vsel %vm1182, %v1177, %v1181
    %v1184 = vmul.f32 %v1155, %v1183
    %v1185 = vmul.f32 %v1158, %v1183
    %v1186 = vmul.f32 %v1161, %v1183
    %v1187 = vmul.f32 %v1164, %v1183
    %v1188 = vmul.f32 %v1167, %v1183
    %v1189 = vmul.f32 %v1170, %v1183
    %v1190 = vmul.f32 %v1173, %v1183
    %v1191 = vmul.f32 %v1176, %v1183
    %v1192 = vsub.f32 %v1130, %v1184
    %v1193 = vsub.f32 %v1133, %v1185
    %v1194 = vsub.f32 %v1136, %v1186
    %v1195 = vsub.f32 %v1139, %v1187
    %v1196 = vsub.f32 %v1142, %v1188
    %v1197 = vsub.f32 %v1145, %v1189
    %v1198 = vsub.f32 %v1148, %v1190
    %v1199 = vsub.f32 %v1151, %v1191
    %v1200 = vmul.f32 %v1192, %v1192
    %v1201 = vmul.f32 %v1193, %v1193
    %v1202 = vmul.f32 %v1194, %v1194
    %v1203 = vmul.f32 %v1195, %v1195
    %v1204 = vmul.f32 %v1196, %v1196
    %v1205 = vmul.f32 %v1197, %v1197
    %v1206 = vmul.f32 %v1198, %v1198
    %v1207 = vmul.f32 %v1199, %v1199
    %v1208 = vsel %vm563, %v1200, 0.0
    %1209 = vadd.xlane.f32.xlu0 %v1208
    %v1210 = vpop.xlane.xlu0 %1209
    %v1211 = vsel %vm563, %v1201, 0.0
    %1212 = vadd.xlane.f32.xlu0 %v1211
    %v1213 = vpop.xlane.xlu0 %1212
    %v1214 = vsel %vm563, %v1202, 0.0
    %1215 = vadd.xlane.f32.xlu0 %v1214
    %v1216 = vpop.xlane.xlu0 %1215
    %v1217 = vsel %vm563, %v1203, 0.0
    %1218 = vadd.xlane.f32.xlu0 %v1217
    %v1219 = vpop.xlane.xlu0 %1218
    %v1220 = vsel %vm563, %v1204, 0.0
    %1221 = vadd.xlane.f32.xlu0 %v1220
    %v1222 = vpop.xlane.xlu0 %1221
    %v1223 = vsel %vm563, %v1205, 0.0
    %1224 = vadd.xlane.f32.xlu0 %v1223
    %v1225 = vpop.xlane.xlu0 %1224
    %v1226 = vsel %vm563, %v1206, 0.0
    %1227 = vadd.xlane.f32.xlu0 %v1226
    %v1228 = vpop.xlane.xlu0 %1227
    %v1229 = vsel %vm563, %v1207, 0.0
    %1230 = vadd.xlane.f32.xlu0 %v1229
    %v1231 = vpop.xlane.xlu0 %1230
    %v1232 = vmul.f32 %v1210, %v1183
    %v1233 = vmul.f32 %v1213, %v1183
    %v1234 = vmul.f32 %v1216, %v1183
    %v1235 = vmul.f32 %v1219, %v1183
    %v1236 = vmul.f32 %v1222, %v1183
    %v1237 = vmul.f32 %v1225, %v1183
    %v1238 = vmul.f32 %v1228, %v1183
    %v1239 = vmul.f32 %v1231, %v1183
    %v1240 = vadd.f32 %v1232, 1e-05
    %v1241 = vadd.f32 %v1233, 1e-05
    %v1242 = vadd.f32 %v1234, 1e-05
    %v1243 = vadd.f32 %v1235, 1e-05
    %v1244 = vadd.f32 %v1236, 1e-05
    %v1245 = vadd.f32 %v1237, 1e-05
    %v1246 = vadd.f32 %v1238, 1e-05
    %v1247 = vadd.f32 %v1239, 1e-05
    %v1248 = vrsqrt.pop %v1240
    %v1249 = vmul.f32 %v1248, %v1240
    %v1250 = vmul.f32 %v1249, %v1248
    %v1251 = vmul.f32 0.5, %v1250
    %v1252 = vsub.f32 1.5, %v1251
    %v1253 = vmul.f32 %v1248, %v1252
    %vm1254 = vweird.f32 %v1240
    %vm1255 = vweird.f32 %v1248
    %vm1256 = vmor %vm1254, %vm1255
    %v1257 = vsel %vm1256, %v1248, %v1253
    %v1258 = vrsqrt.pop %v1241
    %v1259 = vmul.f32 %v1258, %v1241
    %v1260 = vmul.f32 %v1259, %v1258
    %v1261 = vmul.f32 0.5, %v1260
    %v1262 = vsub.f32 1.5, %v1261
    %v1263 = vmul.f32 %v1258, %v1262
    %vm1264 = vweird.f32 %v1241
    %vm1265 = vweird.f32 %v1258
    %vm1266 = vmor %vm1264, %vm1265
    %v1267 = vsel %vm1266, %v1258, %v1263
    %v1268 = vrsqrt.pop %v1242
    %v1269 = vmul.f32 %v1268, %v1242
    %v1270 = vmul.f32 %v1269, %v1268
    %v1271 = vmul.f32 0.5, %v1270
    %v1272 = vsub.f32 1.5, %v1271
    %v1273 = vmul.f32 %v1268, %v1272
    %vm1274 = vweird.f32 %v1242
    %vm1275 = vweird.f32 %v1268
    %vm1276 = vmor %vm1274, %vm1275
    %v1277 = vsel %vm1276, %v1268, %v1273
    %v1278 = vrsqrt.pop %v1243
    %v1279 = vmul.f32 %v1278, %v1243
    %v1280 = vmul.f32 %v1279, %v1278
    %v1281 = vmul.f32 0.5, %v1280
    %v1282 = vsub.f32 1.5, %v1281
    %v1283 = vmul.f32 %v1278, %v1282
    %vm1284 = vweird.f32 %v1243
    %vm1285 = vweird.f32 %v1278
    %vm1286 = vmor %vm1284, %vm1285
    %v1287 = vsel %vm1286, %v1278, %v1283
    %v1288 = vrsqrt.pop %v1244
    %v1289 = vmul.f32 %v1288, %v1244
    %v1290 = vmul.f32 %v1289, %v1288
    %v1291 = vmul.f32 0.5, %v1290
    %v1292 = vsub.f32 1.5, %v1291
    %v1293 = vmul.f32 %v1288, %v1292
    %vm1294 = vweird.f32 %v1244
    %vm1295 = vweird.f32 %v1288
    %vm1296 = vmor %vm1294, %vm1295
    %v1297 = vsel %vm1296, %v1288, %v1293
    %v1298 = vrsqrt.pop %v1245
    %v1299 = vmul.f32 %v1298, %v1245
    %v1300 = vmul.f32 %v1299, %v1298
    %v1301 = vmul.f32 0.5, %v1300
    %v1302 = vsub.f32 1.5, %v1301
    %v1303 = vmul.f32 %v1298, %v1302
    %vm1304 = vweird.f32 %v1245
    %vm1305 = vweird.f32 %v1298
    %vm1306 = vmor %vm1304, %vm1305
    %v1307 = vsel %vm1306, %v1298, %v1303
    %v1308 = vrsqrt.pop %v1246
    %v1309 = vmul.f32 %v1308, %v1246
    %v1310 = vmul.f32 %v1309, %v1308
    %v1311 = vmul.f32 0.5, %v1310
    %v1312 = vsub.f32 1.5, %v1311
    %v1313 = vmul.f32 %v1308, %v1312
    %vm1314 = vweird.f32 %v1246
    %vm1315 = vweird.f32 %v1308
    %vm1316 = vmor %vm1314, %vm1315
    %v1317 = vsel %vm1316, %v1308, %v1313
    %v1318 = vrsqrt.pop %v1247
    %v1319 = vmul.f32 %v1318, %v1247
    %v1320 = vmul.f32 %v1319, %v1318
    %v1321 = vmul.f32 0.5, %v1320
    %v1322 = vsub.f32 1.5, %v1321
    %v1323 = vmul.f32 %v1318, %v1322
    %vm1324 = vweird.f32 %v1247
    %vm1325 = vweird.f32 %v1318
    %vm1326 = vmor %vm1324, %vm1325
    %v1327 = vsel %vm1326, %v1318, %v1323
    %v1328 = vmul.f32 %v1192, %v1257
    %v1329 = vmul.f32 %v1193, %v1267
    %v1330 = vmul.f32 %v1194, %v1277
    %v1331 = vmul.f32 %v1195, %v1287
    %v1332 = vmul.f32 %v1196, %v1297
    %v1333 = vmul.f32 %v1197, %v1307
    %v1334 = vmul.f32 %v1198, %v1317
    %v1335 = vmul.f32 %v1199, %v1327
    %1337 = vset.pattern.permute.xlu0 0
    %1338 = vperm.xlu0 %1337, %v1056
    %v1339 = vpop.permute.xlu0 %1338
    %1342 = vset.pattern.permute.xlu0 0
    %1343 = vperm.xlu0 %1342, %v1057
    %v1344 = vpop.permute.xlu0 %1343
    %1347 = vset.pattern.permute.xlu0 0
    %1348 = vperm.xlu0 %1347, %v1058
    %v1349 = vpop.permute.xlu0 %1348
    %1352 = vset.pattern.permute.xlu0 0
    %1353 = vperm.xlu0 %1352, %v1059
    %v1354 = vpop.permute.xlu0 %1353
    %1357 = vset.pattern.permute.xlu0 0
    %1358 = vperm.xlu0 %1357, %v1060
    %v1359 = vpop.permute.xlu0 %1358
    %1362 = vset.pattern.permute.xlu0 0
    %1363 = vperm.xlu0 %1362, %v1061
    %v1364 = vpop.permute.xlu0 %1363
    %1367 = vset.pattern.permute.xlu0 0
    %1368 = vperm.xlu0 %1367, %v1062
    %v1369 = vpop.permute.xlu0 %1368
    %1372 = vset.pattern.permute.xlu0 0
    %1373 = vperm.xlu0 %1372, %v1063
    %v1374 = vpop.permute.xlu0 %1373
    %v1376 = vmul.f32 %v1328, %v1339
    %v1377 = vmul.f32 %v1329, %v1344
    %v1378 = vmul.f32 %v1330, %v1349
    %v1379 = vmul.f32 %v1331, %v1354
    %v1380 = vmul.f32 %v1332, %v1359
    %v1381 = vmul.f32 %v1333, %v1364
    %v1382 = vmul.f32 %v1334, %v1369
    %v1383 = vmul.f32 %v1335, %v1374
    %1385 = vset.pattern.permute.xlu0 0
    %1386 = vperm.xlu0 %1385, %v1064
    %v1387 = vpop.permute.xlu0 %1386
    %1390 = vset.pattern.permute.xlu0 0
    %1391 = vperm.xlu0 %1390, %v1065
    %v1392 = vpop.permute.xlu0 %1391
    %1395 = vset.pattern.permute.xlu0 0
    %1396 = vperm.xlu0 %1395, %v1066
    %v1397 = vpop.permute.xlu0 %1396
    %1400 = vset.pattern.permute.xlu0 0
    %1401 = vperm.xlu0 %1400, %v1067
    %v1402 = vpop.permute.xlu0 %1401
    %1405 = vset.pattern.permute.xlu0 0
    %1406 = vperm.xlu0 %1405, %v1068
    %v1407 = vpop.permute.xlu0 %1406
    %1410 = vset.pattern.permute.xlu0 0
    %1411 = vperm.xlu0 %1410, %v1069
    %v1412 = vpop.permute.xlu0 %1411
    %1415 = vset.pattern.permute.xlu0 0
    %1416 = vperm.xlu0 %1415, %v1070
    %v1417 = vpop.permute.xlu0 %1416
    %1420 = vset.pattern.permute.xlu0 0
    %1421 = vperm.xlu0 %1420, %v1071
    %v1422 = vpop.permute.xlu0 %1421
    %v1424 = vadd.f32 %v1376, %v1387
    %v1425 = vadd.f32 %v1377, %v1392
    %v1426 = vadd.f32 %v1378, %v1397
    %v1427 = vadd.f32 %v1379, %v1402
    %v1428 = vadd.f32 %v1380, %v1407
    %v1429 = vadd.f32 %v1381, %v1412
    %v1430 = vadd.f32 %v1382, %v1417
    %v1431 = vadd.f32 %v1383, %v1422
    %v1432 = vmax.f32 %v1424, 0.0
    %v1433 = vmax.f32 %v1425, 0.0
    %v1434 = vmax.f32 %v1426, 0.0
    %v1435 = vmax.f32 %v1427, 0.0
    %v1436 = vmax.f32 %v1428, 0.0
    %v1437 = vmax.f32 %v1429, 0.0
    %v1438 = vmax.f32 %v1430, 0.0
    %v1439 = vmax.f32 %v1431, 0.0
    %v1440 = vld [vmem:[%s2 + $0xe0] sm:$0xff]
    %v1441 = vld [vmem:[%s2 + $0xe8] sm:$0xff]
    %v1442 = vld [vmem:[%s2 + $0xf0] sm:$0xff]
    %v1443 = vld [vmem:[%s2 + $0xf8] sm:$0xff]
    %v1444 = vld [vmem:[%s2 + $0x100] sm:$0xff]
    %v1445 = vld [vmem:[%s2 + $0x108] sm:$0xff]
    %v1446 = vld [vmem:[%s2 + $0x110] sm:$0xff]
    %v1447 = vld [vmem:[%s2 + $0x118] sm:$0xff]
    %1456 = vrot.lane.b32.xlu0 %v1432, 120
    %v1457 = vpop.permute.xlu0 %1456
    %1458 = vrot.lane.b32.xlu0 %v1433, 120
    %v1459 = vpop.permute.xlu0 %1458
    %1460 = vrot.lane.b32.xlu0 %v1434, 120
    %v1461 = vpop.permute.xlu0 %1460
    %1462 = vrot.lane.b32.xlu0 %v1435, 120
    %v1463 = vpop.permute.xlu0 %1462
    %1464 = vrot.lane.b32.xlu0 %v1436, 120
    %v1465 = vpop.permute.xlu0 %1464
    %1466 = vrot.lane.b32.xlu0 %v1437, 120
    %v1467 = vpop.permute.xlu0 %1466
    %1468 = vrot.lane.b32.xlu0 %v1438, 120
    %v1469 = vpop.permute.xlu0 %1468
    %1470 = vrot.lane.b32.xlu0 %v1439, 120
    %v1471 = vpop.permute.xlu0 %1470
    %1480 = vrot.lane.b32.xlu0 %v1432, 112
    %v1481 = vpop.permute.xlu0 %1480
    %1482 = vrot.lane.b32.xlu0 %v1433, 112
    %v1483 = vpop.permute.xlu0 %1482
    %1484 = vrot.lane.b32.xlu0 %v1434, 112
    %v1485 = vpop.permute.xlu0 %1484
    %1486 = vrot.lane.b32.xlu0 %v1435, 112
    %v1487 = vpop.permute.xlu0 %1486
    %1488 = vrot.lane.b32.xlu0 %v1436, 112
    %v1489 = vpop.permute.xlu0 %1488
    %1490 = vrot.lane.b32.xlu0 %v1437, 112
    %v1491 = vpop.permute.xlu0 %1490
    %1492 = vrot.lane.b32.xlu0 %v1438, 112
    %v1493 = vpop.permute.xlu0 %1492
    %1494 = vrot.lane.b32.xlu0 %v1439, 112
    %v1495 = vpop.permute.xlu0 %1494
    %1504 = vrot.lane.b32.xlu0 %v1432, 104
    %v1505 = vpop.permute.xlu0 %1504
    %1506 = vrot.lane.b32.xlu0 %v1433, 104
    %v1507 = vpop.permute.xlu0 %1506
    %1508 = vrot.lane.b32.xlu0 %v1434, 104
    %v1509 = vpop.permute.xlu0 %1508
    %1510 = vrot.lane.b32.xlu0 %v1435, 104
    %v1511 = vpop.permute.xlu0 %1510
    %1512 = vrot.lane.b32.xlu0 %v1436, 104
    %v1513 = vpop.permute.xlu0 %1512
    %1514 = vrot.lane.b32.xlu0 %v1437, 104
    %v1515 = vpop.permute.xlu0 %1514
    %1516 = vrot.lane.b32.xlu0 %v1438, 104
    %v1517 = vpop.permute.xlu0 %1516
    %1518 = vrot.lane.b32.xlu0 %v1439, 104
    %v1519 = vpop.permute.xlu0 %1518
    %v1528 = vld [vmem:[%s3 + $0x78] sm:$0xff]
    %v1529 = vld [vmem:[%s3 + $0x80] sm:$0xff]
    %v1530 = vld [vmem:[%s3 + $0x88] sm:$0xff]
    %v1531 = vld [vmem:[%s3 + $0x90] sm:$0xff]
    %v1532 = vld [vmem:[%s3 + $0x120] sm:$0xff]
    %v1533 = vld [vmem:[%s3 + $0x128] sm:$0xff]
    %v1534 = vld [vmem:[%s3 + $0x130] sm:$0xff]
    %v1535 = vld [vmem:[%s3 + $0x138] sm:$0xff]
    %v1536 = vld [vmem:[%s3 + $0x1c8] sm:$0xff]
    %v1537 = vld [vmem:[%s3 + $0x1d0] sm:$0xff]
    %v1538 = vld [vmem:[%s3 + $0x1d8] sm:$0xff]
    %v1539 = vld [vmem:[%s3 + $0x1e0] sm:$0xff]
    %1541 = vset.pattern.permute.xlu0 0
    %1542 = vperm.xlu0 %1541, %v1528
    %v1543 = vpop.permute.xlu0 %1542
    %1546 = vset.pattern.permute.xlu0 0
    %1547 = vperm.xlu0 %1546, %v1529
    %v1548 = vpop.permute.xlu0 %1547
    %1551 = vset.pattern.permute.xlu0 0
    %1552 = vperm.xlu0 %1551, %v1530
    %v1553 = vpop.permute.xlu0 %1552
    %1556 = vset.pattern.permute.xlu0 0
    %1557 = vperm.xlu0 %1556, %v1531
    %v1558 = vpop.permute.xlu0 %1557
    %1560 = vmatpush.msra.mxu0 %v1471
    %1561 = vmatpush.msra.mxu0 %v1469
    %1562 = vmatpush.msra.mxu0 %v1467
    %1563 = vmatpush.msra.mxu0 %v1465
    %1564 = vmatpush.msra.mxu0 %v1463
    %1565 = vmatpush.msra.mxu0 %v1461
    %1566 = vmatpush.msra.mxu0 %v1459
    %1567 = vmatpush.msra.mxu0 %v1457
    %1568 = vmatpush.msra.mxu0 %v1439
    %1569 = vmatpush.msra.mxu0 %v1438
    %1570 = vmatpush.msra.mxu0 %v1437
    %1571 = vmatpush.msra.mxu0 %v1436
    %1572 = vmatpush.msra.mxu0 %v1435
    %1573 = vmatpush.msra.mxu0 %v1434
    %1574 = vmatpush.msra.mxu0 %v1433
    %1575 = vmatpush.msra.mxu0 %v1432
    %1576 = vmatmul.f32.gmra.mxu0 %v1440
    %v1577 = vpop.f32.mrf.mxu0
    %v1578 = vadd.f32 %v1543, %v1577
    %1579 = vmatmul.f32.gmra.mxu0 %v1442
    %v1580 = vpop.f32.mrf.mxu0
    %v1581 = vadd.f32 %v1548, %v1580
    %1582 = vmatmul.f32.gmra.mxu0 %v1444
    %v1583 = vpop.f32.mrf.mxu0
    %v1584 = vadd.f32 %v1553, %v1583
    %1585 = vmatmul.f32.gmra.mxu0 %v1446
    %v1586 = vpop.f32.mrf.mxu0
    %v1587 = vadd.f32 %v1558, %v1586
    %1588 = vdwg.mxu0
    %1589 = vmatpush.msra.mxu0 %v1519
    %1590 = vmatpush.msra.mxu0 %v1517
    %1591 = vmatpush.msra.mxu0 %v1515
    %1592 = vmatpush.msra.mxu0 %v1513
    %1593 = vmatpush.msra.mxu0 %v1511
    %1594 = vmatpush.msra.mxu0 %v1509
    %1595 = vmatpush.msra.mxu0 %v1507
    %1596 = vmatpush.msra.mxu0 %v1505
    %1597 = vmatpush.msra.mxu0 %v1495
    %1598 = vmatpush.msra.mxu0 %v1493
    %1599 = vmatpush.msra.mxu0 %v1491
    %1600 = vmatpush.msra.mxu0 %v1489
    %1601 = vmatpush.msra.mxu0 %v1487
    %1602 = vmatpush.msra.mxu0 %v1485
    %1603 = vmatpush.msra.mxu0 %v1483
    %1604 = vmatpush.msra.mxu0 %v1481
    %1605 = vmatmul.f32.gmra.mxu0 %v1441
    %v1606 = vpop.f32.mrf.mxu0
    %v1607 = vadd.f32 %v1578, %v1606
    %1608 = vmatmul.f32.gmra.mxu0 %v1443
    %v1609 = vpop.f32.mrf.mxu0
    %v1610 = vadd.f32 %v1581, %v1609
    %1611 = vmatmul.f32.gmra.mxu0 %v1445
    %v1612 = vpop.f32.mrf.mxu0
    %v1613 = vadd.f32 %v1584, %v1612
    %1614 = vmatmul.f32.gmra.mxu0 %v1447
    %v1615 = vpop.f32.mrf.mxu0
    %v1616 = vadd.f32 %v1587, %v1615
    %1617 = vdwg.mxu0
    %vm1618 = vcmask 64512
    %v1619 = vsel %vm1618, %v1607, 0.0
    %1620 = vadd.xlane.f32.xlu0 %v1619
    %v1621 = vpop.xlane.xlu0 %1620
    %v1622 = vsel %vm1618, %v1610, 0.0
    %1623 = vadd.xlane.f32.xlu0 %v1622
    %v1624 = vpop.xlane.xlu0 %1623
    %v1625 = vsel %vm1618, %v1613, 0.0
    %1626 = vadd.xlane.f32.xlu0 %v1625
    %v1627 = vpop.xlane.xlu0 %1626
    %v1628 = vsel %vm1618, %v1616, 0.0
    %1629 = vadd.xlane.f32.xlu0 %v1628
    %v1630 = vpop.xlane.xlu0 %1629
    %v1631 = vrcp.pop 8.0
    %v1632 = vmul.f32 8.0, %v1631
    %v1633 = vsub.f32 1.0, %v1632
    %v1634 = vmul.f32 %v1631, %v1633
    %v1635 = vadd.f32 %v1631, %v1634
    %vm1636 = vweird.f32 %v1631
    %v1637 = vsel %vm1636, %v1631, %v1635
    %v1638 = vmul.f32 %v1621, %v1637
    %v1639 = vmul.f32 %v1624, %v1637
    %v1640 = vmul.f32 %v1627, %v1637
    %v1641 = vmul.f32 %v1630, %v1637
    %v1642 = vsub.f32 %v1607, %v1638
    %v1643 = vsub.f32 %v1610, %v1639
    %v1644 = vsub.f32 %v1613, %v1640
    %v1645 = vsub.f32 %v1616, %v1641
    %v1646 = vmul.f32 %v1642, %v1642
    %v1647 = vmul.f32 %v1643, %v1643
    %v1648 = vmul.f32 %v1644, %v1644
    %v1649 = vmul.f32 %v1645, %v1645
    %v1650 = vsel %vm1618, %v1646, 0.0
    %1651 = vadd.xlane.f32.xlu0 %v1650
    %v1652 = vpop.xlane.xlu0 %1651
    %v1653 = vsel %vm1618, %v1647, 0.0
    %1654 = vadd.xlane.f32.xlu0 %v1653
    %v1655 = vpop.xlane.xlu0 %1654
    %v1656 = vsel %vm1618, %v1648, 0.0
    %1657 = vadd.xlane.f32.xlu0 %v1656
    %v1658 = vpop.xlane.xlu0 %1657
    %v1659 = vsel %vm1618, %v1649, 0.0
    %1660 = vadd.xlane.f32.xlu0 %v1659
    %v1661 = vpop.xlane.xlu0 %1660
    %v1662 = vmul.f32 %v1652, %v1637
    %v1663 = vmul.f32 %v1655, %v1637
    %v1664 = vmul.f32 %v1658, %v1637
    %v1665 = vmul.f32 %v1661, %v1637
    %v1666 = vadd.f32 %v1662, 1e-05
    %v1667 = vadd.f32 %v1663, 1e-05
    %v1668 = vadd.f32 %v1664, 1e-05
    %v1669 = vadd.f32 %v1665, 1e-05
    %v1670 = vrsqrt.pop %v1666
    %v1671 = vmul.f32 %v1670, %v1666
    %v1672 = vmul.f32 %v1671, %v1670
    %v1673 = vmul.f32 0.5, %v1672
    %v1674 = vsub.f32 1.5, %v1673
    %v1675 = vmul.f32 %v1670, %v1674
    %vm1676 = vweird.f32 %v1666
    %vm1677 = vweird.f32 %v1670
    %vm1678 = vmor %vm1676, %vm1677
    %v1679 = vsel %vm1678, %v1670, %v1675
    %v1680 = vrsqrt.pop %v1667
    %v1681 = vmul.f32 %v1680, %v1667
    %v1682 = vmul.f32 %v1681, %v1680
    %v1683 = vmul.f32 0.5, %v1682
    %v1684 = vsub.f32 1.5, %v1683
    %v1685 = vmul.f32 %v1680, %v1684
    %vm1686 = vweird.f32 %v1667
    %vm1687 = vweird.f32 %v1680
    %vm1688 = vmor %vm1686, %vm1687
    %v1689 = vsel %vm1688, %v1680, %v1685
    %v1690 = vrsqrt.pop %v1668
    %v1691 = vmul.f32 %v1690, %v1668
    %v1692 = vmul.f32 %v1691, %v1690
    %v1693 = vmul.f32 0.5, %v1692
    %v1694 = vsub.f32 1.5, %v1693
    %v1695 = vmul.f32 %v1690, %v1694
    %vm1696 = vweird.f32 %v1668
    %vm1697 = vweird.f32 %v1690
    %vm1698 = vmor %vm1696, %vm1697
    %v1699 = vsel %vm1698, %v1690, %v1695
    %v1700 = vrsqrt.pop %v1669
    %v1701 = vmul.f32 %v1700, %v1669
    %v1702 = vmul.f32 %v1701, %v1700
    %v1703 = vmul.f32 0.5, %v1702
    %v1704 = vsub.f32 1.5, %v1703
    %v1705 = vmul.f32 %v1700, %v1704
    %vm1706 = vweird.f32 %v1669
    %vm1707 = vweird.f32 %v1700
    %vm1708 = vmor %vm1706, %vm1707
    %v1709 = vsel %vm1708, %v1700, %v1705
    %v1710 = vmul.f32 %v1642, %v1679
    %v1711 = vmul.f32 %v1643, %v1689
    %v1712 = vmul.f32 %v1644, %v1699
    %v1713 = vmul.f32 %v1645, %v1709
    %1715 = vset.pattern.permute.xlu0 0
    %1716 = vperm.xlu0 %1715, %v1532
    %v1717 = vpop.permute.xlu0 %1716
    %1720 = vset.pattern.permute.xlu0 0
    %1721 = vperm.xlu0 %1720, %v1533
    %v1722 = vpop.permute.xlu0 %1721
    %1725 = vset.pattern.permute.xlu0 0
    %1726 = vperm.xlu0 %1725, %v1534
    %v1727 = vpop.permute.xlu0 %1726
    %1730 = vset.pattern.permute.xlu0 0
    %1731 = vperm.xlu0 %1730, %v1535
    %v1732 = vpop.permute.xlu0 %1731
    %v1734 = vmul.f32 %v1710, %v1717
    %v1735 = vmul.f32 %v1711, %v1722
    %v1736 = vmul.f32 %v1712, %v1727
    %v1737 = vmul.f32 %v1713, %v1732
    %1739 = vset.pattern.permute.xlu0 0
    %1740 = vperm.xlu0 %1739, %v1536
    %v1741 = vpop.permute.xlu0 %1740
    %1744 = vset.pattern.permute.xlu0 0
    %1745 = vperm.xlu0 %1744, %v1537
    %v1746 = vpop.permute.xlu0 %1745
    %1749 = vset.pattern.permute.xlu0 0
    %1750 = vperm.xlu0 %1749, %v1538
    %v1751 = vpop.permute.xlu0 %1750
    %1754 = vset.pattern.permute.xlu0 0
    %1755 = vperm.xlu0 %1754, %v1539
    %v1756 = vpop.permute.xlu0 %1755
    %v1758 = vadd.f32 %v1734, %v1741
    %v1759 = vadd.f32 %v1735, %v1746
    %v1760 = vadd.f32 %v1736, %v1751
    %v1761 = vadd.f32 %v1737, %v1756
    %v1762 = vmax.f32 %v1758, 0.0
    %v1763 = vmax.f32 %v1759, 0.0
    %v1764 = vmax.f32 %v1760, 0.0
    %v1765 = vmax.f32 %v1761, 0.0
    %v1766 = vld [vmem:[%s2 + $0x120] sm:$0xff]
    %v1767 = vld [vmem:[%s2 + $0x130] sm:$0xff]
    %1772 = vrot.lane.b32.xlu0 %v1762, 126
    %v1773 = vpop.permute.xlu0 %1772
    %1774 = vrot.lane.b32.xlu0 %v1763, 126
    %v1775 = vpop.permute.xlu0 %1774
    %1776 = vrot.lane.b32.xlu0 %v1764, 126
    %v1777 = vpop.permute.xlu0 %1776
    %1778 = vrot.lane.b32.xlu0 %v1765, 126
    %v1779 = vpop.permute.xlu0 %1778
    %1784 = vrot.lane.b32.xlu0 %v1762, 124
    %v1785 = vpop.permute.xlu0 %1784
    %1786 = vrot.lane.b32.xlu0 %v1763, 124
    %v1787 = vpop.permute.xlu0 %1786
    %1788 = vrot.lane.b32.xlu0 %v1764, 124
    %v1789 = vpop.permute.xlu0 %1788
    %1790 = vrot.lane.b32.xlu0 %v1765, 124
    %v1791 = vpop.permute.xlu0 %1790
    %1796 = vrot.lane.b32.xlu0 %v1762, 122
    %v1797 = vpop.permute.xlu0 %1796
    %1798 = vrot.lane.b32.xlu0 %v1763, 122
    %v1799 = vpop.permute.xlu0 %1798
    %1800 = vrot.lane.b32.xlu0 %v1764, 122
    %v1801 = vpop.permute.xlu0 %1800
    %1802 = vrot.lane.b32.xlu0 %v1765, 122
    %v1803 = vpop.permute.xlu0 %1802
    %v1808 = vld [vmem:[%s3 + $0x98] sm:$0xff]
    %v1809 = vld [vmem:[%s3 + $0xa0] sm:$0xff]
    %v1810 = vld [vmem:[%s3 + $0x140] sm:$0xff]
    %v1811 = vld [vmem:[%s3 + $0x148] sm:$0xff]
    %v1812 = vld [vmem:[%s3 + $0x1e8] sm:$0xff]
    %v1813 = vld [vmem:[%s3 + $0x1f0] sm:$0xff]
    %1815 = vset.pattern.permute.xlu0 0
    %1816 = vperm.xlu0 %1815, %v1808
    %v1817 = vpop.permute.xlu0 %1816
    %1820 = vset.pattern.permute.xlu0 0
    %1821 = vperm.xlu0 %1820, %v1809
    %v1822 = vpop.permute.xlu0 %1821
    %1824 = vmatpush.msra.mxu0 %v1803
    %1825 = vmatpush.msra.mxu0 %v1801
    %1826 = vmatpush.msra.mxu0 %v1799
    %1827 = vmatpush.msra.mxu0 %v1797
    %1828 = vmatpush.msra.mxu0 %v1791
    %1829 = vmatpush.msra.mxu0 %v1789
    %1830 = vmatpush.msra.mxu0 %v1787
    %1831 = vmatpush.msra.mxu0 %v1785
    %1832 = vmatpush.msra.mxu0 %v1779
    %1833 = vmatpush.msra.mxu0 %v1777
    %1834 = vmatpush.msra.mxu0 %v1775
    %1835 = vmatpush.msra.mxu0 %v1773
    %1836 = vmatpush.msra.mxu0 %v1765
    %1837 = vmatpush.msra.mxu0 %v1764
    %1838 = vmatpush.msra.mxu0 %v1763
    %1839 = vmatpush.msra.mxu0 %v1762
    %1840 = vmatmul.f32.gmra.mxu0 %v1766
    %v1841 = vpop.f32.mrf.mxu0
    %v1842 = vadd.f32 %v1817, %v1841
    %1843 = vmatmul.f32.gmra.mxu0 %v1767
    %v1844 = vpop.f32.mrf.mxu0
    %v1845 = vadd.f32 %v1822, %v1844
    %1846 = vdwg.mxu0
    %vm1847 = vcmask 15360
    %v1848 = vsel %vm1847, %v1842, 0.0
    %1849 = vadd.xlane.f32.xlu0 %v1848
    %v1850 = vpop.xlane.xlu0 %1849
    %v1851 = vsel %vm1847, %v1845, 0.0
    %1852 = vadd.xlane.f32.xlu0 %v1851
    %v1853 = vpop.xlane.xlu0 %1852
    %v1854 = vrcp.pop 2.0
    %v1855 = vmul.f32 2.0, %v1854
    %v1856 = vsub.f32 1.0, %v1855
    %v1857 = vmul.f32 %v1854, %v1856
    %v1858 = vadd.f32 %v1854, %v1857
    %vm1859 = vweird.f32 %v1854
    %v1860 = vsel %vm1859, %v1854, %v1858
    %v1861 = vmul.f32 %v1850, %v1860
    %v1862 = vmul.f32 %v1853, %v1860
    %v1863 = vsub.f32 %v1842, %v1861
    %v1864 = vsub.f32 %v1845, %v1862
    %v1865 = vmul.f32 %v1863, %v1863
    %v1866 = vmul.f32 %v1864, %v1864
    %v1867 = vsel %vm1847, %v1865, 0.0
    %1868 = vadd.xlane.f32.xlu0 %v1867
    %v1869 = vpop.xlane.xlu0 %1868
    %v1870 = vsel %vm1847, %v1866, 0.0
    %1871 = vadd.xlane.f32.xlu0 %v1870
    %v1872 = vpop.xlane.xlu0 %1871
    %v1873 = vmul.f32 %v1869, %v1860
    %v1874 = vmul.f32 %v1872, %v1860
    %v1875 = vadd.f32 %v1873, 1e-05
    %v1876 = vadd.f32 %v1874, 1e-05
    %v1877 = vrsqrt.pop %v1875
    %v1878 = vmul.f32 %v1877, %v1875
    %v1879 = vmul.f32 %v1878, %v1877
    %v1880 = vmul.f32 0.5, %v1879
    %v1881 = vsub.f32 1.5, %v1880
    %v1882 = vmul.f32 %v1877, %v1881
    %vm1883 = vweird.f32 %v1875
    %vm1884 = vweird.f32 %v1877
    %vm1885 = vmor %vm1883, %vm1884
    %v1886 = vsel %vm1885, %v1877, %v1882
    %v1887 = vrsqrt.pop %v1876
    %v1888 = vmul.f32 %v1887, %v1876
    %v1889 = vmul.f32 %v1888, %v1887
    %v1890 = vmul.f32 0.5, %v1889
    %v1891 = vsub.f32 1.5, %v1890
    %v1892 = vmul.f32 %v1887, %v1891
    %vm1893 = vweird.f32 %v1876
    %vm1894 = vweird.f32 %v1887
    %vm1895 = vmor %vm1893, %vm1894
    %v1896 = vsel %vm1895, %v1887, %v1892
    %v1897 = vmul.f32 %v1863, %v1886
    %v1898 = vmul.f32 %v1864, %v1896
    %1900 = vset.pattern.permute.xlu0 0
    %1901 = vperm.xlu0 %1900, %v1810
    %v1902 = vpop.permute.xlu0 %1901
    %1905 = vset.pattern.permute.xlu0 0
    %1906 = vperm.xlu0 %1905, %v1811
    %v1907 = vpop.permute.xlu0 %1906
    %v1909 = vmul.f32 %v1897, %v1902
    %v1910 = vmul.f32 %v1898, %v1907
    %1912 = vset.pattern.permute.xlu0 0
    %1913 = vperm.xlu0 %1912, %v1812
    %v1914 = vpop.permute.xlu0 %1913
    %1917 = vset.pattern.permute.xlu0 0
    %1918 = vperm.xlu0 %1917, %v1813
    %v1919 = vpop.permute.xlu0 %1918
    %v1921 = vadd.f32 %v1909, %v1914
    %v1922 = vadd.f32 %v1910, %v1919
    %v1923 = vmax.f32 %v1921, 0.0
    %v1924 = vmax.f32 %v1922, 0.0
    %v1925 = vld [vmem:[%s4] sm:$0xff]
    %v1926 = vld [vmem:[%s4 + $0x8] sm:$0xff]
    %1927 = vxpose.xlu0.b32.start [1/16] %v1923, 128
    %1928 = vxpose.xlu0.b32.cont [2/16] %v1924, 128
    %1929 = vxpose.xlu0.b32.cont [3/16] 0.0, 128
    %1930 = vxpose.xlu0.b32.cont [4/16] 0.0, 128
    %1931 = vxpose.xlu0.b32.cont [5/16] 0.0, 128
    %1932 = vxpose.xlu0.b32.cont [6/16] 0.0, 128
    %1933 = vxpose.xlu0.b32.cont [7/16] 0.0, 128
    %1934 = vxpose.xlu0.b32.cont [8/16] 0.0, 128
    %1935 = vxpose.xlu0.b32.cont [9/16] 0.0, 128
    %1936 = vxpose.xlu0.b32.cont [10/16] 0.0, 128
    %1937 = vxpose.xlu0.b32.cont [11/16] 0.0, 128
    %1938 = vxpose.xlu0.b32.cont [12/16] 0.0, 128
    %1939 = vxpose.xlu0.b32.cont [13/16] 0.0, 128
    %1940 = vxpose.xlu0.b32.cont [14/16] 0.0, 128
    %1941 = vxpose.xlu0.b32.cont [15/16] 0.0, 128
    %1942 = vxpose.xlu0.b32.end [16/16] 0.0, 128
    %v1943 = vpop.trf.xlu0
    %v1944 = vpop.trf.xlu0
    %v1945 = vpop.trf.xlu0
    %v1946 = vpop.trf.xlu0
    %v1947 = vpop.trf.xlu0
    %v1948 = vpop.trf.xlu0
    %v1949 = vpop.trf.xlu0
    %v1950 = vpop.trf.xlu0
    %v1951 = vpop.trf.xlu0
    %v1952 = vpop.trf.xlu0
    %v1953 = vpop.trf.xlu0
    %v1954 = vpop.trf.xlu0
    %v1955 = vpop.trf.xlu0
    %v1956 = vpop.trf.xlu0
    %v1957 = vpop.trf.xlu0
    %v1958 = vpop.trf.xlu0
    %vm1959 = vcmask 130048
    %v1961 = vsel %vm1959, %v1943, 0
    %1963 = vmatpush.msra.mxu0 0.0
    %1964 = vmatpush.msra.mxu0 0.0
    %1965 = vmatpush.msra.mxu0 0.0
    %1966 = vmatpush.msra.mxu0 0.0
    %1967 = vmatpush.msra.mxu0 0.0
    %1968 = vmatpush.msra.mxu0 0.0
    %1969 = vmatpush.msra.mxu0 0.0
    %1970 = vmatpush.msra.mxu0 0.0
    %1971 = vmatpush.msra.mxu0 0.0
    %1972 = vmatpush.msra.mxu0 0.0
    %1973 = vmatpush.msra.mxu0 0.0
    %1974 = vmatpush.msra.mxu0 0.0
    %1975 = vmatpush.msra.mxu0 0.0
    %1976 = vmatpush.msra.mxu0 0.0
    %1977 = vmatpush.msra.mxu0 %v1926
    %1978 = vmatpush.msra.mxu0 %v1925
    %1979 = vmatmul.f32.gmra.mxu0 %v1961
    %v1980 = vpop.f32.mrf.mxu0
    %v1981 = vadd.f32 0.0, %v1980
    %1982 = vdwg.mxu0
    %v1983 = vsub.f32 0.0, %v1981
    %v1984 = vmul.f32 %v1983, 1.442695
    %v1985 = vpow.pop %v1984
    %v1986 = vadd.f32 %v1985, 1.0
    %v1987 = vrcp.pop %v1986
    %v1988 = vmul.f32 %v1986, %v1987
    %v1989 = vsub.f32 1.0, %v1988
    %v1990 = vmul.f32 %v1987, %v1989
    %v1991 = vadd.f32 %v1987, %v1990
    %vm1992 = vweird.f32 %v1986
    %vm1993 = vweird.f32 %v1987
    %vm1994 = vmor %vm1992, %vm1993
    %v1995 = vsel %vm1994, %v1987, %v1991
    %v1996 = vand.u32 2147483647, %v1986
    %vm1997 = vcmp.eq.f32.partialorder %v1996, 8.507059e+37
    %v1998 = vand.u32 %v1986, 2147483648
    %v1999 = vor.u32 1.1754944e-38, %v1998
    %v2000 = vsel %vm1997, %v1999, %v1995
    %v2001 = vmul.f32 1.0, %v2000
    %vm2002 = vcmask 1024
    %2003 = vst.msk [vmem:[%s5] sm:$0x3] %vm2002, %v2001
    %vm2004 = vcmask 82952
    %v2005 = vsel %vm2004, %v1981, -inf
    %v2006 = vrot.slane %v2005, 4
    %v2007 = vmax.f32 %v2005, %v2006
    %v2008 = vrot.slane %v2007, 2
    %v2009 = vmax.f32 %v2007, %v2008
    %v2010 = vrot.slane %v2009, 1
    %v2011 = vmax.f32 %v2009, %v2010
    %v2012 = vsub.f32 %v1981, %v2011
    %v2013 = vmul.f32 %v2012, 1.442695
    %v2014 = vpow.pop %v2013
    %v2015 = vsel %vm2004, %v2014, 0.0
    %v2016 = vrot.slane %v2015, 4
    %v2017 = vadd.f32 %v2015, %v2016
    %v2018 = vrot.slane %v2017, 2
    %v2019 = vadd.f32 %v2017, %v2018
    %v2020 = vrot.slane %v2019, 1
    %v2021 = vadd.f32 %v2019, %v2020
    %v2022 = vrcp.pop %v2021
    %v2023 = vmul.f32 %v2021, %v2022
    %v2024 = vsub.f32 1.0, %v2023
    %v2025 = vmul.f32 %v2022, %v2024
    %v2026 = vadd.f32 %v2022, %v2025
    %vm2027 = vweird.f32 %v2021
    %vm2028 = vweird.f32 %v2022
    %vm2029 = vmor %vm2027, %vm2028
    %v2030 = vsel %vm2029, %v2022, %v2026
    %v2031 = vand.u32 2147483647, %v2021
    %vm2032 = vcmp.eq.f32.partialorder %v2031, 8.507059e+37
    %v2033 = vand.u32 %v2021, 2147483648
    %v2034 = vor.u32 1.1754944e-38, %v2033
    %v2035 = vsel %vm2032, %v2034, %v2030
    %v2036 = vmul.f32 %v2014, %v2035
    %2038 = vrot.lane.b32.xlu0 %v2036, 127
    %v2039 = vpop.permute.xlu0 %2038
    %vm2041 = vcmask 74752
    %2042 = vst.msk [vmem:[#allocation2] sm:$0x3] %vm2041, %v2039
    // Predicated region
    $region22: #{discriminator_forward.1} parent=1 // pred_check
      _
    $region23: #{discriminator_forward.1} parent=1 // pred_check_branch
      %2044 = sbr.rel (0) target = $region25
    $region24: #{discriminator_forward.1} parent=1 // pred_region
      _
    $region25: #{discriminator_forward.1} parent=1 // pred_fallthru
      _
    // Predicated region
    $region26: #{discriminator_forward.1} parent=1 // pred_check
      _
    $region27: #{discriminator_forward.1} parent=1 // pred_check_branch
      %2046 = sbr.rel (0) target = $region29
    $region28: #{discriminator_forward.1} parent=1 // pred_region
      %2048 = vsyncadd [#allocation3], 0
      %s2050 = sshll.u32 [#allocation2], 4
      %s2051 = int_to_ptr.vmem [resolvable:$true] %s2050
      %s2052 = sshll.u32 %s6, 4
      %s2053 = int_to_ptr.hbm [resolvable:$true] %s2052
      %2055 = dma.vmem_to_hbm [thread:$0]  %s2051, 32, %s2053, [#allocation3]
    $region29: #{discriminator_forward.1} parent=1 // pred_fallthru
      _
    // Predicated region
    $region30: #{discriminator_forward.1} parent=1 // pred_check
      _
    $region31: #{discriminator_forward.1} parent=1 // pred_check_branch
      %2057 = sbr.rel (0) target = $region33
    $region32: #{discriminator_forward.1} parent=1 // pred_region
      _
    $region33: #{discriminator_forward.1} parent=1 // pred_fallthru
      _
    // Predicated region
    $region34: #{discriminator_forward.1} parent=1 // pred_check
      _
    $region35: #{discriminator_forward.1} parent=1 // pred_check_branch
      %2059 = sbr.rel (0) target = $region37
    $region36: #{discriminator_forward.1} parent=1 // pred_region
      %2061 = dma.done [#allocation3], 32
    $region37: #{discriminator_forward.1} parent=1 // pred_fallthru
      _
    %2062 = vsyncpa [#allocation3], 1

</llo_original>
